<compile_context>
chip_gen: v7x
topology: tpu7x:2x2x1
jax: 0.10.0
libtpu: 0.0.40
codegen_flags: <defaults>
</compile_context>

<pallas_src>
import jax
import jax.numpy as jnp
import numpy as np
from jax.experimental import pallas as pl
from jax.experimental.pallas import tpu as pltpu


# ------------------------------ Pallas kernel -------------------------------

def _siamese_kernel(x_ref, w1_ref, b1_ref, w2_ref, b2_ref,
                    wf1_ref, bf1_ref, wf2_ref, bf2_ref, wf3_ref, bf3_ref,
                    wc_ref, bc_ref, out_ref):
    """Full forward pass for a (TILE_N, 256) tile of flattened 16x16 images."""
    f32 = jnp.float32
    x = x_ref[...]                                                  # (T, 256)

    # conv1 + bias + relu for all 4 pool offsets at once, then 2x2 max-pool.
    c1 = jnp.dot(x, w1_ref[...], preferred_element_type=f32) + b1_ref[...]
    c1 = jnp.maximum(c1, 0.0)                                       # (T, 1024)
    p1 = jnp.maximum(jnp.maximum(c1[:, 0:256], c1[:, 256:512]),
                     jnp.maximum(c1[:, 512:768], c1[:, 768:1024]))  # (T, 256)

    # conv2 + bias + relu for its 4 output positions, then 2x2 max-pool.
    c2 = jnp.dot(p1, w2_ref[...], preferred_element_type=f32) + b2_ref[...]
    c2 = jnp.maximum(c2, 0.0)                                       # (T, 512)
    p2 = jnp.maximum(jnp.maximum(c2[:, 0:128], c2[:, 128:256]),
                     jnp.maximum(c2[:, 256:384], c2[:, 384:512]))   # (T, 128)

    # FC stack (fc1 weight is zero-padded to 128 input rows so p2 feeds directly).
    h1 = jnp.maximum(jnp.dot(p2, wf1_ref[...], preferred_element_type=f32)
                     + bf1_ref[...], 0.0)                           # (T, 120)
    h2 = jnp.maximum(jnp.dot(h1, wf2_ref[...], preferred_element_type=f32)
                     + bf2_ref[...], 0.0)                           # (T, 84)
    e = jnp.dot(h2, wf3_ref[...], preferred_element_type=f32) + bf3_ref[...]   # (T, 64)

    # Classifier: linear + softmax(dim=1).
    logits = jnp.dot(e, wc_ref[...], preferred_element_type=f32) + bc_ref[...]  # (T, 10)
    z = logits - jnp.max(logits, axis=-1, keepdims=True)
    ez = jnp.exp(z)
    sm = ez / jnp.sum(ez, axis=-1, keepdims=True)

    # One lane-dense 128-wide store: [embedding(64) | softmax(10) | zeros(54)].
    pad = jnp.zeros((e.shape[0], 128 - 64 - 10), dtype=f32)
    out_ref[...] = jnp.concatenate([e, sm, pad], axis=-1)


# --------------------------- pallas_call wrapper ----------------------------

def _fused_forward(x_flat, kp, tile_n):
    b = x_flat.shape[0]
    assert b % tile_n == 0

    def rep(a):  # full-array weight block, resident across grid steps
        return pl.BlockSpec(a.shape, lambda n: (0,) * a.ndim)

    return pl.pallas_call(
        _siamese_kernel,
        out_shape=jax.ShapeDtypeStruct((b, 128), jnp.float32),
        grid=(b // tile_n,),
        in_specs=[pl.BlockSpec((tile_n, 256), lambda n: (n, 0)),
                  rep(kp["W1"]), rep(kp["B1"]), rep(kp["W2"]), rep(kp["B2"]),
                  rep(kp["wf1"]), rep(kp["bf1"]), rep(kp["wf2"]), rep(kp["bf2"]),
                  rep(kp["wf3"]), rep(kp["bf3"]), rep(kp["wc"]), rep(kp["bc"])],
        out_specs=pl.BlockSpec((tile_n, 128), lambda n: (n, 0)),
        compiler_params=pltpu.CompilerParams(dimension_semantics=("parallel",)),
    )(x_flat, kp["W1"], kp["B1"], kp["W2"], kp["B2"],
      kp["wf1"], kp["bf1"], kp["wf2"], kp["bf2"],
      kp["wf3"], kp["bf3"], kp["wc"], kp["bc"])


def siamese_forward(x1, x2, kp, tile_n=8):
    """Returns ((e1, softmax1), (e2, softmax2)) exactly like SiameseNet.forward."""
    n1 = x1.shape[0]
    x = jnp.concatenate([x1, x2], axis=0).astype(jnp.float32)    # weights shared
    b0 = x.shape[0]
    x_flat = x.reshape(b0, 16 * 16)
    b_pad = -(-b0 // tile_n) * tile_n
    if b_pad != b0:
        x_flat = jnp.pad(x_flat, ((0, b_pad - b0), (0, 0)))
    out = _fused_forward(x_flat, kp, tile_n)[:b0]
    e, c = out[:, :64], out[:, 64:74]
    return (e[:n1], c[:n1]), (e[n1:], c[n1:])


# ------------------------------ parameters ----------------------------------

def init_params(key, scale=0.1):
    ks = jax.random.split(key, 12)
    r = lambda k, s: scale * jax.random.normal(k, s, jnp.float32)
    return {
        "w1": r(ks[0], (6, 1, 5, 5)),   "b1": r(ks[1], (6,)),
        "w2": r(ks[2], (16, 6, 5, 5)),  "b2": r(ks[3], (16,)),
        "wf1": r(ks[4], (120, 16)),     "bf1": r(ks[5], (120,)),
        "wf2": r(ks[6], (84, 120)),     "bf2": r(ks[7], (84,)),
        "wf3": r(ks[8], (64, 84)),      "bf3": r(ks[9], (64,)),
        "wc": r(ks[10], (10, 64)),      "bc": r(ks[11], (10,)),
    }


def expand_params(p):
    """PyTorch-layout params -> expanded, lane-padded GEMM weights (one-off)."""
    w1 = np.asarray(p["w1"], np.float32)   # (6, 1, 5, 5)
    b1 = np.asarray(p["b1"], np.float32)
    w2 = np.asarray(p["w2"], np.float32)   # (16, 6, 5, 5)
    b2 = np.asarray(p["b2"], np.float32)

    # conv1 + 2x2 max-pool.  Row = raw pixel u*16+v.  Column chunk q = pool
    # offset (a,b), padded 216 -> 256; col = q*256 + (i*6+j)*6 + c.
    W1 = np.zeros((256, 1024), np.float32)
    B1 = np.zeros((1, 1024), np.float32)
    for a in range(2):
        for b in range(2):
            q = 2 * a + b
            for i in range(6):
                for j in range(6):
                    for c in range(6):
                        col = q * 256 + (i * 6 + j) * 6 + c
                        B1[0, col] = b1[c]
                        for kh in range(5):
                            for kw in range(5):
                                u = 2 * i + a + kh
                                v = 2 * j + b + kw
                                W1[u * 16 + v, col] = w1[c, 0, kh, kw]

    # conv2 + 2x2 max-pool.  Row = pooled1 feature (i*6+j)*6 + ci (rows >= 216
    # are zero).  Column chunk = output position (oi,oj), padded 16 -> 128.
    W2 = np.zeros((256, 512), np.float32)
    B2 = np.zeros((1, 512), np.float32)
    for oi in range(2):
        for oj in range(2):
            pos = 2 * oi + oj
            for co in range(16):
                col = pos * 128 + co
                B2[0, col] = b2[co]
                for kh in range(5):
                    for kw in range(5):
                        i, j = oi + kh, oj + kw
                        for ci in range(6):
                            W2[(i * 6 + j) * 6 + ci, col] = w2[co, ci, kh, kw]

    wf1e = np.zeros((128, 120), np.float32)           # zero-padded 16 -> 128 rows
    wf1e[:16, :] = np.asarray(p["wf1"], np.float32).T

    kp = dict(
        W1=W1, B1=B1, W2=W2, B2=B2,
        wf1=wf1e, bf1=np.asarray(p["bf1"], np.float32).reshape(1, 120),
        wf2=np.asarray(p["wf2"], np.float32).T,
        bf2=np.asarray(p["bf2"], np.float32).reshape(1, 84),
        wf3=np.asarray(p["wf3"], np.float32).T,
        bf3=np.asarray(p["bf3"], np.float32).reshape(1, 64),
        wc=np.asarray(p["wc"], np.float32).T,
        bc=np.asarray(p["bc"], np.float32).reshape(1, 10),
    )
    return {k: jnp.asarray(v) for k, v in kp.items()}


# -------------------------- pure-JAX reference ------------------------------

def reference_forward_once(x, p):
    hp = jax.lax.Precision.HIGHEST
    n = x.shape[0]
    c1 = jax.lax.conv_general_dilated(
        x, p["w1"], (1, 1), "VALID",
        dimension_numbers=("NCHW", "OIHW", "NCHW"), precision=hp)
    c1 = jnp.maximum(c1 + p["b1"][None, :, None, None], 0.0)        # (n,6,12,12)
    p1 = c1.reshape(n, 6, 6, 2, 6, 2).max(axis=(3, 5))              # (n,6,6,6)
    c2 = jax.lax.conv_general_dilated(
        p1, p["w2"], (1, 1), "VALID",
        dimension_numbers=("NCHW", "OIHW", "NCHW"), precision=hp)
    c2 = jnp.maximum(c2 + p["b2"][None, :, None, None], 0.0)        # (n,16,2,2)
    p2 = c2.reshape(n, 16, 1, 2, 1, 2).max(axis=(3, 5)).reshape(n, 16)
    h1 = jnp.maximum(jnp.dot(p2, p["wf1"].T, precision=hp) + p["bf1"], 0.0)
    h2 = jnp.maximum(jnp.dot(h1, p["wf2"].T, precision=hp) + p["bf2"], 0.0)
    e = jnp.dot(h2, p["wf3"].T, precision=hp) + p["bf3"]
    logits = jnp.dot(e, p["wc"].T, precision=hp) + p["bc"]
    return e, jax.nn.softmax(logits, axis=1)


# --------------------------------- main --------------------------------------

if __name__ == "__main__":
    key = jax.random.PRNGKey(0)
    kp_key, x1_key, x2_key = jax.random.split(key, 3)

    params = init_params(kp_key)
    kp = expand_params(params)

    N = 8                                    # per-branch batch; total = 16 -> grid=(2,)
    x1 = jax.random.normal(x1_key, (N, 1, 16, 16), jnp.float32)
    x2 = jax.random.normal(x2_key, (N, 1, 16, 16), jnp.float32)

    fwd = jax.jit(siamese_forward, static_argnames=("tile_n",))
    (e1, c1), (e2, c2) = jax.block_until_ready(fwd(x1, x2, kp, tile_n=8))

    # sanity vs. pure-JAX reference (original PyTorch-layout parameters)
    re1, rc1 = reference_forward_once(x1, params)
    re2, rc2 = reference_forward_once(x2, params)
    assert e1.shape == (N, 64) and c1.shape == (N, 10)
    assert e2.shape == (N, 64) and c2.shape == (N, 10)
    assert jnp.allclose(e1, re1, atol=1e-2, rtol=1e-2)
    assert jnp.allclose(e2, re2, atol=1e-2, rtol=1e-2)
    assert jnp.allclose(c1, rc1, atol=5e-3, rtol=5e-3)
    assert jnp.allclose(c2, rc2, atol=5e-3, rtol=5e-3)
    assert jnp.allclose(jnp.sum(c1, axis=1), jnp.ones((N,)), atol=1e-5)
    assert jnp.allclose(jnp.sum(c2, axis=1), jnp.ones((N,)), atol=1e-5)

    print("KERNEL_OK")
</pallas_src>

<mosaic_0001>
module attributes {stable_mosaic.version = 11 : i64} {
  func.func @_siamese_kernel(%arg0: i32, %arg1: memref<8x256xf32, #tpu.memory_space<vmem>>, %arg2: memref<256x1024xf32, #tpu.memory_space<vmem>>, %arg3: memref<1x1024xf32, #tpu.memory_space<vmem>>, %arg4: memref<256x512xf32, #tpu.memory_space<vmem>>, %arg5: memref<1x512xf32, #tpu.memory_space<vmem>>, %arg6: memref<128x120xf32, #tpu.memory_space<vmem>>, %arg7: memref<1x120xf32, #tpu.memory_space<vmem>>, %arg8: memref<120x84xf32, #tpu.memory_space<vmem>>, %arg9: memref<1x84xf32, #tpu.memory_space<vmem>>, %arg10: memref<84x64xf32, #tpu.memory_space<vmem>>, %arg11: memref<1x64xf32, #tpu.memory_space<vmem>>, %arg12: memref<64x10xf32, #tpu.memory_space<vmem>>, %arg13: memref<1x10xf32, #tpu.memory_space<vmem>>, %arg14: memref<8x128xf32, #tpu.memory_space<vmem>>) attributes {dimension_semantics = [#tpu.dimension_semantics<parallel>], iteration_bounds = array<i64: 2>, scalar_prefetch = 0 : i64, scratch_operands = 0 : i64, tpu.core_type = #tpu.core_type<tc>, window_params = [{transform_indices = @transform_0, window_bounds = array<i64: 8, 256>}, {pipeline_mode = #tpu.pipeline_mode<synchronous>, transform_indices = @transform_1, window_bounds = array<i64: 256, 1024>}, {pipeline_mode = #tpu.pipeline_mode<synchronous>, transform_indices = @transform_2, window_bounds = array<i64: 1, 1024>}, {pipeline_mode = #tpu.pipeline_mode<synchronous>, transform_indices = @transform_3, window_bounds = array<i64: 256, 512>}, {pipeline_mode = #tpu.pipeline_mode<synchronous>, transform_indices = @transform_4, window_bounds = array<i64: 1, 512>}, {pipeline_mode = #tpu.pipeline_mode<synchronous>, transform_indices = @transform_5, window_bounds = array<i64: 128, 120>}, {pipeline_mode = #tpu.pipeline_mode<synchronous>, transform_indices = @transform_6, window_bounds = array<i64: 1, 120>}, {pipeline_mode = #tpu.pipeline_mode<synchronous>, transform_indices = @transform_7, window_bounds = array<i64: 120, 84>}, {pipeline_mode = #tpu.pipeline_mode<synchronous>, transform_indices = @transform_8, window_bounds = array<i64: 1, 84>}, {pipeline_mode = #tpu.pipeline_mode<synchronous>, transform_indices = @transform_9, window_bounds = array<i64: 84, 64>}, {pipeline_mode = #tpu.pipeline_mode<synchronous>, transform_indices = @transform_10, window_bounds = array<i64: 1, 64>}, {pipeline_mode = #tpu.pipeline_mode<synchronous>, transform_indices = @transform_11, window_bounds = array<i64: 64, 10>}, {pipeline_mode = #tpu.pipeline_mode<synchronous>, transform_indices = @transform_12, window_bounds = array<i64: 1, 10>}, {transform_indices = @transform_13, window_bounds = array<i64: 8, 128>}]} {
    %c0 = arith.constant 0 : index
    %c0_0 = arith.constant 0 : index
    %0 = vector.load %arg1[%c0, %c0_0] : memref<8x256xf32, #tpu.memory_space<vmem>>, vector<8x256xf32>
    %c0_1 = arith.constant 0 : index
    %c0_2 = arith.constant 0 : index
    %1 = vector.load %arg2[%c0_1, %c0_2] : memref<256x1024xf32, #tpu.memory_space<vmem>>, vector<256x1024xf32>
    %cst = arith.constant dense<0.000000e+00> : vector<8x1024xf32>
    %2 = tpu.matmul %0, %1, %cst {dimension_numbers = #tpu.dot_dimension_numbers<[1], [0], [0], [1], [0, 0, 1, 1], [], []>} : vector<8x256xf32>, vector<256x1024xf32>, vector<8x1024xf32> -> vector<8x1024xf32>
    %c0_3 = arith.constant 0 : index
    %c0_4 = arith.constant 0 : index
    %3 = vector.load %arg3[%c0_3, %c0_4] : memref<1x1024xf32, #tpu.memory_space<vmem>>, vector<1x1024xf32>
    %4 = vector.broadcast %3 : vector<1x1024xf32> to vector<8x1024xf32>
    %5 = arith.addf %2, %4 : vector<8x1024xf32>
    %cst_5 = arith.constant 0.000000e+00 : f32
    %6 = vector.broadcast %cst_5 : f32 to vector<8x1024xf32>
    %7 = arith.maximumf %5, %6 : vector<8x1024xf32>
    %8 = vector.extract_strided_slice %7 {offsets = [0, 0], sizes = [8, 256], strides = [1, 1]} : vector<8x1024xf32> to vector<8x256xf32>
    %9 = vector.extract_strided_slice %7 {offsets = [0, 256], sizes = [8, 256], strides = [1, 1]} : vector<8x1024xf32> to vector<8x256xf32>
    %10 = arith.maximumf %8, %9 : vector<8x256xf32>
    %11 = vector.extract_strided_slice %7 {offsets = [0, 512], sizes = [8, 256], strides = [1, 1]} : vector<8x1024xf32> to vector<8x256xf32>
    %12 = vector.extract_strided_slice %7 {offsets = [0, 768], sizes = [8, 256], strides = [1, 1]} : vector<8x1024xf32> to vector<8x256xf32>
    %13 = arith.maximumf %11, %12 : vector<8x256xf32>
    %14 = arith.maximumf %10, %13 : vector<8x256xf32>
    %c0_6 = arith.constant 0 : index
    %c0_7 = arith.constant 0 : index
    %15 = vector.load %arg4[%c0_6, %c0_7] : memref<256x512xf32, #tpu.memory_space<vmem>>, vector<256x512xf32>
    %cst_8 = arith.constant dense<0.000000e+00> : vector<8x512xf32>
    %16 = tpu.matmul %14, %15, %cst_8 {dimension_numbers = #tpu.dot_dimension_numbers<[1], [0], [0], [1], [0, 0, 1, 1], [], []>} : vector<8x256xf32>, vector<256x512xf32>, vector<8x512xf32> -> vector<8x512xf32>
    %c0_9 = arith.constant 0 : index
    %c0_10 = arith.constant 0 : index
    %17 = vector.load %arg5[%c0_9, %c0_10] : memref<1x512xf32, #tpu.memory_space<vmem>>, vector<1x512xf32>
    %18 = vector.broadcast %17 : vector<1x512xf32> to vector<8x512xf32>
    %19 = arith.addf %16, %18 : vector<8x512xf32>
    %cst_11 = arith.constant 0.000000e+00 : f32
    %20 = vector.broadcast %cst_11 : f32 to vector<8x512xf32>
    %21 = arith.maximumf %19, %20 : vector<8x512xf32>
    %22 = vector.extract_strided_slice %21 {offsets = [0, 0], sizes = [8, 128], strides = [1, 1]} : vector<8x512xf32> to vector<8x128xf32>
    %23 = vector.extract_strided_slice %21 {offsets = [0, 128], sizes = [8, 128], strides = [1, 1]} : vector<8x512xf32> to vector<8x128xf32>
    %24 = arith.maximumf %22, %23 : vector<8x128xf32>
    %25 = vector.extract_strided_slice %21 {offsets = [0, 256], sizes = [8, 128], strides = [1, 1]} : vector<8x512xf32> to vector<8x128xf32>
    %26 = vector.extract_strided_slice %21 {offsets = [0, 384], sizes = [8, 128], strides = [1, 1]} : vector<8x512xf32> to vector<8x128xf32>
    %27 = arith.maximumf %25, %26 : vector<8x128xf32>
    %28 = arith.maximumf %24, %27 : vector<8x128xf32>
    %c0_12 = arith.constant 0 : index
    %c0_13 = arith.constant 0 : index
    %29 = vector.load %arg6[%c0_12, %c0_13] : memref<128x120xf32, #tpu.memory_space<vmem>>, vector<128x120xf32>
    %cst_14 = arith.constant dense<0.000000e+00> : vector<8x120xf32>
    %30 = tpu.matmul %28, %29, %cst_14 {dimension_numbers = #tpu.dot_dimension_numbers<[1], [0], [0], [1], [0, 0, 1, 1], [], []>} : vector<8x128xf32>, vector<128x120xf32>, vector<8x120xf32> -> vector<8x120xf32>
    %c0_15 = arith.constant 0 : index
    %c0_16 = arith.constant 0 : index
    %31 = vector.load %arg7[%c0_15, %c0_16] : memref<1x120xf32, #tpu.memory_space<vmem>>, vector<1x120xf32>
    %32 = vector.broadcast %31 : vector<1x120xf32> to vector<8x120xf32>
    %33 = arith.addf %30, %32 : vector<8x120xf32>
    %cst_17 = arith.constant 0.000000e+00 : f32
    %34 = vector.broadcast %cst_17 : f32 to vector<8x120xf32>
    %35 = arith.maximumf %33, %34 : vector<8x120xf32>
    %c0_18 = arith.constant 0 : index
    %c0_19 = arith.constant 0 : index
    %36 = vector.load %arg8[%c0_18, %c0_19] : memref<120x84xf32, #tpu.memory_space<vmem>>, vector<120x84xf32>
    %cst_20 = arith.constant dense<0.000000e+00> : vector<8x84xf32>
    %37 = tpu.matmul %35, %36, %cst_20 {dimension_numbers = #tpu.dot_dimension_numbers<[1], [0], [0], [1], [0, 0, 1, 1], [], []>} : vector<8x120xf32>, vector<120x84xf32>, vector<8x84xf32> -> vector<8x84xf32>
    %c0_21 = arith.constant 0 : index
    %c0_22 = arith.constant 0 : index
    %38 = vector.load %arg9[%c0_21, %c0_22] : memref<1x84xf32, #tpu.memory_space<vmem>>, vector<1x84xf32>
    %39 = vector.broadcast %38 : vector<1x84xf32> to vector<8x84xf32>
    %40 = arith.addf %37, %39 : vector<8x84xf32>
    %cst_23 = arith.constant 0.000000e+00 : f32
    %41 = vector.broadcast %cst_23 : f32 to vector<8x84xf32>
    %42 = arith.maximumf %40, %41 : vector<8x84xf32>
    %c0_24 = arith.constant 0 : index
    %c0_25 = arith.constant 0 : index
    %43 = vector.load %arg10[%c0_24, %c0_25] : memref<84x64xf32, #tpu.memory_space<vmem>>, vector<84x64xf32>
    %cst_26 = arith.constant dense<0.000000e+00> : vector<8x64xf32>
    %44 = tpu.matmul %42, %43, %cst_26 {dimension_numbers = #tpu.dot_dimension_numbers<[1], [0], [0], [1], [0, 0, 1, 1], [], []>} : vector<8x84xf32>, vector<84x64xf32>, vector<8x64xf32> -> vector<8x64xf32>
    %c0_27 = arith.constant 0 : index
    %c0_28 = arith.constant 0 : index
    %45 = vector.load %arg11[%c0_27, %c0_28] : memref<1x64xf32, #tpu.memory_space<vmem>>, vector<1x64xf32>
    %46 = vector.broadcast %45 : vector<1x64xf32> to vector<8x64xf32>
    %47 = arith.addf %44, %46 : vector<8x64xf32>
    %c0_29 = arith.constant 0 : index
    %c0_30 = arith.constant 0 : index
    %48 = vector.load %arg12[%c0_29, %c0_30] : memref<64x10xf32, #tpu.memory_space<vmem>>, vector<64x10xf32>
    %cst_31 = arith.constant dense<0.000000e+00> : vector<8x10xf32>
    %49 = tpu.matmul %47, %48, %cst_31 {dimension_numbers = #tpu.dot_dimension_numbers<[1], [0], [0], [1], [0, 0, 1, 1], [], []>} : vector<8x64xf32>, vector<64x10xf32>, vector<8x10xf32> -> vector<8x10xf32>
    %c0_32 = arith.constant 0 : index
    %c0_33 = arith.constant 0 : index
    %50 = vector.load %arg13[%c0_32, %c0_33] : memref<1x10xf32, #tpu.memory_space<vmem>>, vector<1x10xf32>
    %51 = vector.broadcast %50 : vector<1x10xf32> to vector<8x10xf32>
    %52 = arith.addf %49, %51 : vector<8x10xf32>
    %cst_34 = arith.constant dense<0xFF800000> : vector<8xf32>
    %53 = vector.multi_reduction <maximumf>, %52, %cst_34 [1] : vector<8x10xf32> to vector<8xf32>
    %54 = vector.shape_cast %53 : vector<8xf32> to vector<8x1xf32>
    %55 = vector.broadcast %54 : vector<8x1xf32> to vector<8x10xf32>
    %56 = arith.subf %52, %55 : vector<8x10xf32>
    %57 = math.exp %56 : vector<8x10xf32>
    %cst_35 = arith.constant dense<0.000000e+00> : vector<8xf32>
    %58 = vector.multi_reduction <add>, %57, %cst_35 [1] : vector<8x10xf32> to vector<8xf32>
    %59 = vector.shape_cast %58 : vector<8xf32> to vector<8x1xf32>
    %60 = vector.broadcast %59 : vector<8x1xf32> to vector<8x10xf32>
    %61 = arith.divf %57, %60 : vector<8x10xf32>
    %cst_36 = arith.constant 0.000000e+00 : f32
    %62 = vector.broadcast %cst_36 : f32 to vector<8x54xf32>
    %63 = tpu.concatenate %47, %61, %62 in 1 : vector<8x64xf32>, vector<8x10xf32>, vector<8x54xf32> -> vector<8x128xf32>
    %c0_37 = arith.constant 0 : index
    %c0_38 = arith.constant 0 : index
    %64 = vector.load %arg14[%c0_37, %c0_38] : memref<8x128xf32, #tpu.memory_space<vmem>>, vector<8x128xf32>
    tpu.vector_store %arg14[%c0_37, %c0_38], %63 {strides = array<i32>} : memref<8x128xf32, #tpu.memory_space<vmem>>, vector<8x128xf32>,
    return
  }
  func.func @transform_0(%arg0: i32) -> (i32, i32) {
    %c0_i32 = arith.constant 0 : i32
    %c0_i32_0 = arith.constant 0 : i32
    return %arg0, %c0_i32 : i32, i32
  }
  func.func @transform_1(%arg0: i32) -> (i32, i32) {
    %c0_i32 = arith.constant 0 : i32
    %c0_i32_0 = arith.constant 0 : i32
    %c0_i32_1 = arith.constant 0 : i32
    return %c0_i32, %c0_i32_0 : i32, i32
  }
  func.func @transform_2(%arg0: i32) -> (i32, i32) {
    %c0_i32 = arith.constant 0 : i32
    %c0_i32_0 = arith.constant 0 : i32
    %c0_i32_1 = arith.constant 0 : i32
    return %c0_i32, %c0_i32_0 : i32, i32
  }
  func.func @transform_3(%arg0: i32) -> (i32, i32) {
    %c0_i32 = arith.constant 0 : i32
    %c0_i32_0 = arith.constant 0 : i32
    %c0_i32_1 = arith.constant 0 : i32
    return %c0_i32, %c0_i32_0 : i32, i32
  }
  func.func @transform_4(%arg0: i32) -> (i32, i32) {
    %c0_i32 = arith.constant 0 : i32
    %c0_i32_0 = arith.constant 0 : i32
    %c0_i32_1 = arith.constant 0 : i32
    return %c0_i32, %c0_i32_0 : i32, i32
  }
  func.func @transform_5(%arg0: i32) -> (i32, i32) {
    %c0_i32 = arith.constant 0 : i32
    %c0_i32_0 = arith.constant 0 : i32
    %c0_i32_1 = arith.constant 0 : i32
    return %c0_i32, %c0_i32_0 : i32, i32
  }
  func.func @transform_6(%arg0: i32) -> (i32, i32) {
    %c0_i32 = arith.constant 0 : i32
    %c0_i32_0 = arith.constant 0 : i32
    %c0_i32_1 = arith.constant 0 : i32
    return %c0_i32, %c0_i32_0 : i32, i32
  }
  func.func @transform_7(%arg0: i32) -> (i32, i32) {
    %c0_i32 = arith.constant 0 : i32
    %c0_i32_0 = arith.constant 0 : i32
    %c0_i32_1 = arith.constant 0 : i32
    return %c0_i32, %c0_i32_0 : i32, i32
  }
  func.func @transform_8(%arg0: i32) -> (i32, i32) {
    %c0_i32 = arith.constant 0 : i32
    %c0_i32_0 = arith.constant 0 : i32
    %c0_i32_1 = arith.constant 0 : i32
    return %c0_i32, %c0_i32_0 : i32, i32
  }
  func.func @transform_9(%arg0: i32) -> (i32, i32) {
    %c0_i32 = arith.constant 0 : i32
    %c0_i32_0 = arith.constant 0 : i32
    %c0_i32_1 = arith.constant 0 : i32
    return %c0_i32, %c0_i32_0 : i32, i32
  }
  func.func @transform_10(%arg0: i32) -> (i32, i32) {
    %c0_i32 = arith.constant 0 : i32
    %c0_i32_0 = arith.constant 0 : i32
    %c0_i32_1 = arith.constant 0 : i32
    return %c0_i32, %c0_i32_0 : i32, i32
  }
  func.func @transform_11(%arg0: i32) -> (i32, i32) {
    %c0_i32 = arith.constant 0 : i32
    %c0_i32_0 = arith.constant 0 : i32
    %c0_i32_1 = arith.constant 0 : i32
    return %c0_i32, %c0_i32_0 : i32, i32
  }
  func.func @transform_12(%arg0: i32) -> (i32, i32) {
    %c0_i32 = arith.constant 0 : i32
    %c0_i32_0 = arith.constant 0 : i32
    %c0_i32_1 = arith.constant 0 : i32
    return %c0_i32, %c0_i32_0 : i32, i32
  }
  func.func @transform_13(%arg0: i32) -> (i32, i32) {
    %c0_i32 = arith.constant 0 : i32
    %c0_i32_0 = arith.constant 0 : i32
    return %arg0, %c0_i32 : i32, i32
  }
}

</mosaic_0001>

<llo_original>
// kernel: siamese_forward.1
$region0: #{siamese_forward.1}
  #allocation0 [shape = 'u32[]', space=smem, size = 0x4, offset = 0x4, fixed_abs, tag = 'smem constant byte address 0x4 - core index']
  #allocation1 [shape = 'u32[144,128]{1,0:T(1,128)}', space=vmem, size = 0x12000, scoped, tag = 'internal scratch']
  %s0 = inlined_call_operand.vmem [shape: f32[16,256], index: 0, kind: input, shape index: {}]
  %s1 = inlined_call_operand.hbm [shape: f32[256,1024], index: 1, kind: input, shape index: {}]
  %s2 = inlined_call_operand.vmem [shape: f32[1,1024], index: 2, kind: input, shape index: {}]
  %s3 = inlined_call_operand.vmem [shape: f32[256,512], index: 3, kind: input, shape index: {}]
  %s4 = inlined_call_operand.vmem [shape: f32[1,512], index: 4, kind: input, shape index: {}]
  %s5 = inlined_call_operand.vmem [shape: f32[128,120], index: 5, kind: input, shape index: {}]
  %s6 = inlined_call_operand.vmem [shape: f32[1,120], index: 6, kind: input, shape index: {}]
  %s7 = inlined_call_operand.vmem [shape: f32[120,84], index: 7, kind: input, shape index: {}]
  %s8 = inlined_call_operand.vmem [shape: f32[1,84], index: 8, kind: input, shape index: {}]
  %s9 = inlined_call_operand.vmem [shape: f32[84,64], index: 9, kind: input, shape index: {}]
  %s10 = inlined_call_operand.vmem [shape: f32[1,64], index: 10, kind: input, shape index: {}]
  %s11 = inlined_call_operand.vmem [shape: f32[64,10], index: 11, kind: input, shape index: {}]
  %s12 = inlined_call_operand.vmem [shape: f32[1,10], index: 12, kind: input, shape index: {}]
  %s13 = inlined_call_operand.vmem [shape: f32[16,128], index: 13, kind: output, shape index: {}]
  %s14 = sld [smem:[#allocation0]]
  $region89: #{siamese_forward.1} parent=0
    _
  %s16 = ssub.s32 1, %s14
  %s17 = scalar_select 0, %s16, %s14
  $region1: #{siamese_forward.1} parent=0
    #allocation2 [shape = 'u8[1048576]{0}', space=vmem, size = 0x100000, scoped, tag = 'input window, operand 1, single buffered']
    #allocation3 [shape = 's32[2]{0}', space=sflag, size = 0x8, scoped, tag = 'scoped memory for siamese_forward.1']
    %18 = vsyncpa [#allocation3], 0
    loop: start=0, step=1, limit=4
    $region2: #{siamese_forward.1} parent=1 // loop_pre_header
      _
    $region3: #{siamese_forward.1} parent=1 // loop_header
      %s20 = sphi 0, %s24
      %p21 = scmp.ge.s32.totalorder %s20, 4
      %s30 = sphi 0, %s32
      %s33 = sphi 0, %s30
      %s34 = sphi 0, %s33
      %s50 = sphi 0, %s34
      %s54 = sphi 0, %s54
      %s56 = sphi 0, %s54
      %s57 = sphi 0, %s56
      %s71 = sphi 0, %s57
      %s75 = sphi 0, %s75
      %s77 = sphi 0, %s75
      %s78 = sphi 0, %s77
      %s92 = sphi 0, %s78
      %s96 = sphi 0, %s96
      %s98 = sphi 0, %s96
      %s99 = sphi 0, %s98
      %s113 = sphi 0, %s99
      %s117 = sphi 0, %s117
      %s119 = sphi 0, %s117
      %s120 = sphi 0, %s119
      %s134 = sphi 0, %s120
      %s138 = sphi 0, %s138
      %s140 = sphi 0, %s138
      %s141 = sphi 0, %s140
      %s155 = sphi 0, %s141
      %s159 = sphi 0, %s159
      %s161 = sphi 0, %s159
      %s162 = sphi 0, %s161
      %s176 = sphi 0, %s162
      %s180 = sphi 0, %s180
      %s182 = sphi 0, %s180
      %s183 = sphi 0, %s182
      %s197 = sphi 0, %s183
      %s201 = sphi 0, %s201
      %s203 = sphi 0, %s201
      %s204 = sphi 0, %s203
      %s218 = sphi 0, %s204
      %s222 = sphi 0, %s222
      %s224 = sphi 0, %s222
      %s225 = sphi 0, %s224
      %s239 = sphi 0, %s225
      %s243 = sphi 0, %s243
      %s245 = sphi 0, %s243
      %s246 = sphi 0, %s245
      %s260 = sphi 0, %s246
      %s264 = sphi 0, %s264
      %s266 = sphi 0, %s264
      %s267 = sphi 0, %s266
      %s281 = sphi 0, %s267
      %s285 = sphi 0, %s285
      %s287 = sphi 0, %s285
      %s288 = sphi 0, %s287
      %s302 = sphi 0, %s288
      %s308 = sphi 0, %s310
      %s311 = sphi 0, %s308
      %s312 = sphi 0, %s311
      %s328 = sphi 0, %s312
    $region4: #{siamese_forward.1} parent=1 // loop_header_branch
      %23 = sbr.rel (%p21) target = $region8
    $region5: #{siamese_forward.1} parent=1 // loop_body
      %s25 = ssub.s32 %s20, 1
      %s26 = ssub.s32 %s20, 2
      %s27 = sadd.s32 %s20, 1
      %s28 = ssub.s32 %s20, %s27
      %p29 = scmp.eq.s32.totalorder %s28, 0
      %s31 = sadd.s32 %s30, 1
      %s32 = scalar_select %p29, %s30, %s31
      %p35 = pneg %p29
      %p36 = scmp.eq.s32.totalorder %s20, 1
      %p37 = por %p35, %p36
      %p38 = scmp.ne.s32.totalorder %s30, %s33
      %p39 = scmp.eq.s32.totalorder %s20, 0
      %p40 = por %p38, %p39
      %p41 = scmp.ne.s32.totalorder %s30, %s33
      %p42 = scmp.eq.s32.totalorder %s25, 1
      %p43 = por %p41, %p42
      %p44 = scmp.ne.s32.totalorder %s33, %s34
      %p45 = scmp.eq.s32.totalorder %s25, 0
      %p46 = por %p44, %p45
      %p47 = scmp.ne.s32.totalorder %s33, %s34
      %p48 = scmp.eq.s32.totalorder %s26, 1
      %p49 = por %p47, %p48
      %p51 = scmp.ne.s32.totalorder %s34, %s50
      %p52 = scmp.eq.s32.totalorder %s26, 0
      %p53 = por %p51, %p52
      %s55 = sadd.s32 %s54, 1
      %p58 = scmp.eq.s32.totalorder %s20, 1
      %p59 = scmp.ne.s32.totalorder %s54, %s56
      %p60 = scmp.eq.s32.totalorder %s20, 0
      %p61 = por %p59, %p60
      %p62 = scmp.ne.s32.totalorder %s54, %s56
      %p63 = scmp.eq.s32.totalorder %s25, 1
      %p64 = por %p62, %p63
      %p65 = scmp.ne.s32.totalorder %s56, %s57
      %p66 = scmp.eq.s32.totalorder %s25, 0
      %p67 = por %p65, %p66
      %p68 = scmp.ne.s32.totalorder %s56, %s57
      %p69 = scmp.eq.s32.totalorder %s26, 1
      %p70 = por %p68, %p69
      %p72 = scmp.ne.s32.totalorder %s57, %s71
      %p73 = scmp.eq.s32.totalorder %s26, 0
      %p74 = por %p72, %p73
      %s76 = sadd.s32 %s75, 1
      %p79 = scmp.eq.s32.totalorder %s20, 1
      %p80 = scmp.ne.s32.totalorder %s75, %s77
      %p81 = scmp.eq.s32.totalorder %s20, 0
      %p82 = por %p80, %p81
      %p83 = scmp.ne.s32.totalorder %s75, %s77
      %p84 = scmp.eq.s32.totalorder %s25, 1
      %p85 = por %p83, %p84
      %p86 = scmp.ne.s32.totalorder %s77, %s78
      %p87 = scmp.eq.s32.totalorder %s25, 0
      %p88 = por %p86, %p87
      %p89 = scmp.ne.s32.totalorder %s77, %s78
      %p90 = scmp.eq.s32.totalorder %s26, 1
      %p91 = por %p89, %p90
      %p93 = scmp.ne.s32.totalorder %s78, %s92
      %p94 = scmp.eq.s32.totalorder %s26, 0
      %p95 = por %p93, %p94
      %s97 = sadd.s32 %s96, 1
      %p100 = scmp.eq.s32.totalorder %s20, 1
      %p101 = scmp.ne.s32.totalorder %s96, %s98
      %p102 = scmp.eq.s32.totalorder %s20, 0
      %p103 = por %p101, %p102
      %p104 = scmp.ne.s32.totalorder %s96, %s98
      %p105 = scmp.eq.s32.totalorder %s25, 1
      %p106 = por %p104, %p105
      %p107 = scmp.ne.s32.totalorder %s98, %s99
      %p108 = scmp.eq.s32.totalorder %s25, 0
      %p109 = por %p107, %p108
      %p110 = scmp.ne.s32.totalorder %s98, %s99
      %p111 = scmp.eq.s32.totalorder %s26, 1
      %p112 = por %p110, %p111
      %p114 = scmp.ne.s32.totalorder %s99, %s113
      %p115 = scmp.eq.s32.totalorder %s26, 0
      %p116 = por %p114, %p115
      %s118 = sadd.s32 %s117, 1
      %p121 = scmp.eq.s32.totalorder %s20, 1
      %p122 = scmp.ne.s32.totalorder %s117, %s119
      %p123 = scmp.eq.s32.totalorder %s20, 0
      %p124 = por %p122, %p123
      %p125 = scmp.ne.s32.totalorder %s117, %s119
      %p126 = scmp.eq.s32.totalorder %s25, 1
      %p127 = por %p125, %p126
      %p128 = scmp.ne.s32.totalorder %s119, %s120
      %p129 = scmp.eq.s32.totalorder %s25, 0
      %p130 = por %p128, %p129
      %p131 = scmp.ne.s32.totalorder %s119, %s120
      %p132 = scmp.eq.s32.totalorder %s26, 1
      %p133 = por %p131, %p132
      %p135 = scmp.ne.s32.totalorder %s120, %s134
      %p136 = scmp.eq.s32.totalorder %s26, 0
      %p137 = por %p135, %p136
      %s139 = sadd.s32 %s138, 1
      %p142 = scmp.eq.s32.totalorder %s20, 1
      %p143 = scmp.ne.s32.totalorder %s138, %s140
      %p144 = scmp.eq.s32.totalorder %s20, 0
      %p145 = por %p143, %p144
      %p146 = scmp.ne.s32.totalorder %s138, %s140
      %p147 = scmp.eq.s32.totalorder %s25, 1
      %p148 = por %p146, %p147
      %p149 = scmp.ne.s32.totalorder %s140, %s141
      %p150 = scmp.eq.s32.totalorder %s25, 0
      %p151 = por %p149, %p150
      %p152 = scmp.ne.s32.totalorder %s140, %s141
      %p153 = scmp.eq.s32.totalorder %s26, 1
      %p154 = por %p152, %p153
      %p156 = scmp.ne.s32.totalorder %s141, %s155
      %p157 = scmp.eq.s32.totalorder %s26, 0
      %p158 = por %p156, %p157
      %s160 = sadd.s32 %s159, 1
      %p163 = scmp.eq.s32.totalorder %s20, 1
      %p164 = scmp.ne.s32.totalorder %s159, %s161
      %p165 = scmp.eq.s32.totalorder %s20, 0
      %p166 = por %p164, %p165
      %p167 = scmp.ne.s32.totalorder %s159, %s161
      %p168 = scmp.eq.s32.totalorder %s25, 1
      %p169 = por %p167, %p168
      %p170 = scmp.ne.s32.totalorder %s161, %s162
      %p171 = scmp.eq.s32.totalorder %s25, 0
      %p172 = por %p170, %p171
      %p173 = scmp.ne.s32.totalorder %s161, %s162
      %p174 = scmp.eq.s32.totalorder %s26, 1
      %p175 = por %p173, %p174
      %p177 = scmp.ne.s32.totalorder %s162, %s176
      %p178 = scmp.eq.s32.totalorder %s26, 0
      %p179 = por %p177, %p178
      %s181 = sadd.s32 %s180, 1
      %p184 = scmp.eq.s32.totalorder %s20, 1
      %p185 = scmp.ne.s32.totalorder %s180, %s182
      %p186 = scmp.eq.s32.totalorder %s20, 0
      %p187 = por %p185, %p186
      %p188 = scmp.ne.s32.totalorder %s180, %s182
      %p189 = scmp.eq.s32.totalorder %s25, 1
      %p190 = por %p188, %p189
      %p191 = scmp.ne.s32.totalorder %s182, %s183
      %p192 = scmp.eq.s32.totalorder %s25, 0
      %p193 = por %p191, %p192
      %p194 = scmp.ne.s32.totalorder %s182, %s183
      %p195 = scmp.eq.s32.totalorder %s26, 1
      %p196 = por %p194, %p195
      %p198 = scmp.ne.s32.totalorder %s183, %s197
      %p199 = scmp.eq.s32.totalorder %s26, 0
      %p200 = por %p198, %p199
      %s202 = sadd.s32 %s201, 1
      %p205 = scmp.eq.s32.totalorder %s20, 1
      %p206 = scmp.ne.s32.totalorder %s201, %s203
      %p207 = scmp.eq.s32.totalorder %s20, 0
      %p208 = por %p206, %p207
      %p209 = scmp.ne.s32.totalorder %s201, %s203
      %p210 = scmp.eq.s32.totalorder %s25, 1
      %p211 = por %p209, %p210
      %p212 = scmp.ne.s32.totalorder %s203, %s204
      %p213 = scmp.eq.s32.totalorder %s25, 0
      %p214 = por %p212, %p213
      %p215 = scmp.ne.s32.totalorder %s203, %s204
      %p216 = scmp.eq.s32.totalorder %s26, 1
      %p217 = por %p215, %p216
      %p219 = scmp.ne.s32.totalorder %s204, %s218
      %p220 = scmp.eq.s32.totalorder %s26, 0
      %p221 = por %p219, %p220
      %s223 = sadd.s32 %s222, 1
      %p226 = scmp.eq.s32.totalorder %s20, 1
      %p227 = scmp.ne.s32.totalorder %s222, %s224
      %p228 = scmp.eq.s32.totalorder %s20, 0
      %p229 = por %p227, %p228
      %p230 = scmp.ne.s32.totalorder %s222, %s224
      %p231 = scmp.eq.s32.totalorder %s25, 1
      %p232 = por %p230, %p231
      %p233 = scmp.ne.s32.totalorder %s224, %s225
      %p234 = scmp.eq.s32.totalorder %s25, 0
      %p235 = por %p233, %p234
      %p236 = scmp.ne.s32.totalorder %s224, %s225
      %p237 = scmp.eq.s32.totalorder %s26, 1
      %p238 = por %p236, %p237
      %p240 = scmp.ne.s32.totalorder %s225, %s239
      %p241 = scmp.eq.s32.totalorder %s26, 0
      %p242 = por %p240, %p241
      %s244 = sadd.s32 %s243, 1
      %p247 = scmp.eq.s32.totalorder %s20, 1
      %p248 = scmp.ne.s32.totalorder %s243, %s245
      %p249 = scmp.eq.s32.totalorder %s20, 0
      %p250 = por %p248, %p249
      %p251 = scmp.ne.s32.totalorder %s243, %s245
      %p252 = scmp.eq.s32.totalorder %s25, 1
      %p253 = por %p251, %p252
      %p254 = scmp.ne.s32.totalorder %s245, %s246
      %p255 = scmp.eq.s32.totalorder %s25, 0
      %p256 = por %p254, %p255
      %p257 = scmp.ne.s32.totalorder %s245, %s246
      %p258 = scmp.eq.s32.totalorder %s26, 1
      %p259 = por %p257, %p258
      %p261 = scmp.ne.s32.totalorder %s246, %s260
      %p262 = scmp.eq.s32.totalorder %s26, 0
      %p263 = por %p261, %p262
      %s265 = sadd.s32 %s264, 1
      %p268 = scmp.eq.s32.totalorder %s20, 1
      %p269 = scmp.ne.s32.totalorder %s264, %s266
      %p270 = scmp.eq.s32.totalorder %s20, 0
      %p271 = por %p269, %p270
      %p272 = scmp.ne.s32.totalorder %s264, %s266
      %p273 = scmp.eq.s32.totalorder %s25, 1
      %p274 = por %p272, %p273
      %p275 = scmp.ne.s32.totalorder %s266, %s267
      %p276 = scmp.eq.s32.totalorder %s25, 0
      %p277 = por %p275, %p276
      %p278 = scmp.ne.s32.totalorder %s266, %s267
      %p279 = scmp.eq.s32.totalorder %s26, 1
      %p280 = por %p278, %p279
      %p282 = scmp.ne.s32.totalorder %s267, %s281
      %p283 = scmp.eq.s32.totalorder %s26, 0
      %p284 = por %p282, %p283
      %s286 = sadd.s32 %s285, 1
      %p289 = scmp.eq.s32.totalorder %s20, 1
      %p290 = scmp.ne.s32.totalorder %s285, %s287
      %p291 = scmp.eq.s32.totalorder %s20, 0
      %p292 = por %p290, %p291
      %p293 = scmp.ne.s32.totalorder %s285, %s287
      %p294 = scmp.eq.s32.totalorder %s25, 1
      %p295 = por %p293, %p294
      %p296 = scmp.ne.s32.totalorder %s287, %s288
      %p297 = scmp.eq.s32.totalorder %s25, 0
      %p298 = por %p296, %p297
      %p299 = scmp.ne.s32.totalorder %s287, %s288
      %p300 = scmp.eq.s32.totalorder %s26, 1
      %p301 = por %p299, %p300
      %p303 = scmp.ne.s32.totalorder %s288, %s302
      %p304 = scmp.eq.s32.totalorder %s26, 0
      %p305 = por %p303, %p304
      %s306 = ssub.s32 %s20, %s27
      %p307 = scmp.eq.s32.totalorder %s306, 0
      %s309 = sadd.s32 %s308, 1
      %s310 = scalar_select %p307, %s308, %s309
      %p313 = pneg %p307
      %p314 = scmp.eq.s32.totalorder %s20, 1
      %p315 = por %p313, %p314
      %p316 = scmp.ne.s32.totalorder %s308, %s311
      %p317 = scmp.eq.s32.totalorder %s20, 0
      %p318 = por %p316, %p317
      %p319 = scmp.ne.s32.totalorder %s308, %s311
      %p320 = scmp.eq.s32.totalorder %s25, 1
      %p321 = por %p319, %p320
      %p322 = scmp.ne.s32.totalorder %s311, %s312
      %p323 = scmp.eq.s32.totalorder %s25, 0
      %p324 = por %p322, %p323
      %p325 = scmp.ne.s32.totalorder %s311, %s312
      %p326 = scmp.eq.s32.totalorder %s26, 1
      %p327 = por %p325, %p326
      %p329 = scmp.ne.s32.totalorder %s312, %s328
      %p330 = scmp.eq.s32.totalorder %s26, 0
      %p331 = por %p329, %p330
      %p332 = scmp.le.s32.totalorder 1, %s20
      %p333 = scmp.lt.s32.totalorder %s20, 3
      %p334 = pnand %p332, %p333
      %p335 = pneg %p334
      // Predicated region
      $region9: #{siamese_forward.1} parent=5 // pred_check
        _
      $region10: #{siamese_forward.1} parent=5 // pred_check_branch
        %337 = sbr.rel (%p334) target = $region12
      $region11: #{siamese_forward.1} parent=5 // pred_region
        %s338 = ssub.s32 %s20, 1
        // Predicated region
        $region13: #{siamese_forward.1} parent=11 // pred_check
          %p339 = pneg %p67
        $region14: #{siamese_forward.1} parent=11 // pred_check_branch
          %341 = sbr.rel (%p339) target = $region16
        $region15: #{siamese_forward.1} parent=11 // pred_region
          %s343 = ssub.s32 32768, 32768
          %344 = vsyncadd [#allocation3], %s343
          %s345 = sshll.u32 [#allocation2], 4
          %s346 = int_to_ptr.vmem [resolvable:$true] %s345
          %351 = dma.hbm_to_vmem [thread:$0]  %s1, 32768, %s346, [#allocation3], 1024, 1024, 64
        $region16: #{siamese_forward.1} parent=11 // pred_fallthru
          _
        // Predicated region
        $region17: #{siamese_forward.1} parent=11 // pred_check
          %p352 = pneg %p88
        $region18: #{siamese_forward.1} parent=11 // pred_check_branch
          %354 = sbr.rel (%p352) target = $region20
        $region19: #{siamese_forward.1} parent=11 // pred_region
          _
        $region20: #{siamese_forward.1} parent=11 // pred_fallthru
          _
        // Predicated region
        $region21: #{siamese_forward.1} parent=11 // pred_check
          %p355 = pneg %p109
        $region22: #{siamese_forward.1} parent=11 // pred_check_branch
          %357 = sbr.rel (%p355) target = $region24
        $region23: #{siamese_forward.1} parent=11 // pred_region
          _
        $region24: #{siamese_forward.1} parent=11 // pred_fallthru
          _
        // Predicated region
        $region25: #{siamese_forward.1} parent=11 // pred_check
          %p358 = pneg %p130
        $region26: #{siamese_forward.1} parent=11 // pred_check_branch
          %360 = sbr.rel (%p358) target = $region28
        $region27: #{siamese_forward.1} parent=11 // pred_region
          _
        $region28: #{siamese_forward.1} parent=11 // pred_fallthru
          _
        // Predicated region
        $region29: #{siamese_forward.1} parent=11 // pred_check
          %p361 = pneg %p151
        $region30: #{siamese_forward.1} parent=11 // pred_check_branch
          %363 = sbr.rel (%p361) target = $region32
        $region31: #{siamese_forward.1} parent=11 // pred_region
          _
        $region32: #{siamese_forward.1} parent=11 // pred_fallthru
          _
        // Predicated region
        $region33: #{siamese_forward.1} parent=11 // pred_check
          %p364 = pneg %p172
        $region34: #{siamese_forward.1} parent=11 // pred_check_branch
          %366 = sbr.rel (%p364) target = $region36
        $region35: #{siamese_forward.1} parent=11 // pred_region
          _
        $region36: #{siamese_forward.1} parent=11 // pred_fallthru
          _
        // Predicated region
        $region37: #{siamese_forward.1} parent=11 // pred_check
          %p367 = pneg %p193
        $region38: #{siamese_forward.1} parent=11 // pred_check_branch
          %369 = sbr.rel (%p367) target = $region40
        $region39: #{siamese_forward.1} parent=11 // pred_region
          _
        $region40: #{siamese_forward.1} parent=11 // pred_fallthru
          _
        // Predicated region
        $region41: #{siamese_forward.1} parent=11 // pred_check
          %p370 = pneg %p214
        $region42: #{siamese_forward.1} parent=11 // pred_check_branch
          %372 = sbr.rel (%p370) target = $region44
        $region43: #{siamese_forward.1} parent=11 // pred_region
          _
        $region44: #{siamese_forward.1} parent=11 // pred_fallthru
          _
        // Predicated region
        $region45: #{siamese_forward.1} parent=11 // pred_check
          %p373 = pneg %p235
        $region46: #{siamese_forward.1} parent=11 // pred_check_branch
          %375 = sbr.rel (%p373) target = $region48
        $region47: #{siamese_forward.1} parent=11 // pred_region
          _
        $region48: #{siamese_forward.1} parent=11 // pred_fallthru
          _
        // Predicated region
        $region49: #{siamese_forward.1} parent=11 // pred_check
          %p376 = pneg %p256
        $region50: #{siamese_forward.1} parent=11 // pred_check_branch
          %378 = sbr.rel (%p376) target = $region52
        $region51: #{siamese_forward.1} parent=11 // pred_region
          _
        $region52: #{siamese_forward.1} parent=11 // pred_fallthru
          _
        // Predicated region
        $region53: #{siamese_forward.1} parent=11 // pred_check
          %p379 = pneg %p277
        $region54: #{siamese_forward.1} parent=11 // pred_check_branch
          %381 = sbr.rel (%p379) target = $region56
        $region55: #{siamese_forward.1} parent=11 // pred_region
          _
        $region56: #{siamese_forward.1} parent=11 // pred_fallthru
          _
        // Predicated region
        $region57: #{siamese_forward.1} parent=11 // pred_check
          %p382 = pneg %p298
        $region58: #{siamese_forward.1} parent=11 // pred_check_branch
          %384 = sbr.rel (%p382) target = $region60
        $region59: #{siamese_forward.1} parent=11 // pred_region
          _
        $region60: #{siamese_forward.1} parent=11 // pred_fallthru
          _
      $region12: #{siamese_forward.1} parent=5 // pred_fallthru
        _
      %p385 = scmp.lt.s32.totalorder %s20, 2
      // Predicated region
      $region61: #{siamese_forward.1} parent=5 // pred_check
        %p386 = pneg %p385
      $region62: #{siamese_forward.1} parent=5 // pred_check_branch
        %388 = sbr.rel (%p386) target = $region64
      $region63: #{siamese_forward.1} parent=5 // pred_region
        // Predicated region
        $region65: #{siamese_forward.1} parent=63 // pred_check
          %p389 = pneg %p40
        $region66: #{siamese_forward.1} parent=63 // pred_check_branch
          %391 = sbr.rel (%p389) target = $region68
        $region67: #{siamese_forward.1} parent=63 // pred_region
          %p392 = scmp.lt.s32.totalorder %s20, 1
          %s393 = scalar_select %p392, %s20, 1
          %s394 = smul.addr %s393, 2
          %s395 = smul.addr %s394, 8
          %s396 = scalar_lea.vmem %s0, %s395
        $region68: #{siamese_forward.1} parent=63 // pred_fallthru
          _
      $region64: #{siamese_forward.1} parent=5 // pred_fallthru
        _
      %p397 = scmp.le.s32.totalorder 1, %s20
      %p398 = scmp.lt.s32.totalorder %s20, 3
      %p399 = pnand %p397, %p398
      %p400 = pneg %p399
      // Predicated region
      $region69: #{siamese_forward.1} parent=5 // pred_check
        _
      $region70: #{siamese_forward.1} parent=5 // pred_check_branch
        %402 = sbr.rel (%p399) target = $region72
      $region71: #{siamese_forward.1} parent=5 // pred_region
        %s403 = ssub.s32 %s20, 1
        // Predicated region
        $region73: #{siamese_forward.1} parent=71 // pred_check
          %p404 = pneg %p67
        $region74: #{siamese_forward.1} parent=71 // pred_check_branch
          %406 = sbr.rel (%p404) target = $region76
        $region75: #{siamese_forward.1} parent=71 // pred_region
          %407 = dma.done [#allocation3], 32768
        $region76: #{siamese_forward.1} parent=71 // pred_fallthru
          _
        %p408 = scmp.lt.s32.totalorder %s25, 1
        %s409 = scalar_select %p408, %s25, 1
        %s410 = smul.addr %s409, 2
        %s411 = smul.addr %s410, 8
        %s412 = scalar_lea.vmem %s0, %s411
        %p413 = pneg %p46
        %p414 = pneg %p43
        %p415 = pneg %p67
        %p416 = pneg %p64
        %p417 = pneg %p88
        %p418 = pneg %p85
        %p419 = pneg %p109
        %p420 = pneg %p106
        %p421 = pneg %p130
        %p422 = pneg %p127
        %p423 = pneg %p151
        %p424 = pneg %p148
        %p425 = pneg %p172
        %p426 = pneg %p169
        %p427 = pneg %p193
        %p428 = pneg %p190
        %p429 = pneg %p214
        %p430 = pneg %p211
        %p431 = pneg %p235
        %p432 = pneg %p232
        %p433 = pneg %p256
        %p434 = pneg %p253
        %p435 = pneg %p277
        %p436 = pneg %p274
        %p437 = pneg %p298
        %p438 = pneg %p295
        %p439 = pneg %p324
        %p440 = pneg %p321
        %p441 = scmp.lt.s32.totalorder %s25, 1
        %s442 = scalar_select %p441, %s25, 1
        %s443 = smul.addr %s442, 8
        %s444 = scalar_lea.vmem %s13, %s443
        %p445 = scmp.lt.s32.totalorder %s25, 1
        %s446 = scalar_select %p445, %s25, 1
        %s447 = smul.addr %s446, 2
        %s448 = smul.addr %s447, 8
        %s449 = scalar_lea.vmem %s0, %s448
        %p450 = scmp.lt.s32.totalorder %s25, 1
        %s451 = scalar_select %p450, %s25, 1
        %s452 = smul.addr %s451, 8
        %s453 = scalar_lea.vmem %s13, %s452
        %v454 = vld [vmem:[%s449] sm:$0xff]
        %v455 = vld [vmem:[%s449 + $0x8] sm:$0xff]
        %v456 = vld [vmem:[#allocation2] sm:$0xff]
        %v457 = vld [vmem:[#allocation2 + $0x8] sm:$0xff]
        %v458 = vld [vmem:[#allocation2 + $0x10] sm:$0xff]
        %v459 = vld [vmem:[#allocation2 + $0x18] sm:$0xff]
        %v460 = vld [vmem:[#allocation2 + $0x20] sm:$0xff]
        %v461 = vld [vmem:[#allocation2 + $0x28] sm:$0xff]
        %v462 = vld [vmem:[#allocation2 + $0x30] sm:$0xff]
        %v463 = vld [vmem:[#allocation2 + $0x38] sm:$0xff]
        %v464 = vld [vmem:[#allocation2 + $0x40] sm:$0xff]
        %v465 = vld [vmem:[#allocation2 + $0x48] sm:$0xff]
        %v466 = vld [vmem:[#allocation2 + $0x50] sm:$0xff]
        %v467 = vld [vmem:[#allocation2 + $0x58] sm:$0xff]
        %v468 = vld [vmem:[#allocation2 + $0x60] sm:$0xff]
        %v469 = vld [vmem:[#allocation2 + $0x68] sm:$0xff]
        %v470 = vld [vmem:[#allocation2 + $0x70] sm:$0xff]
        %v471 = vld [vmem:[#allocation2 + $0x78] sm:$0xff]
        %v472 = vld [vmem:[#allocation2 + $0x80] sm:$0xff]
        %v473 = vld [vmem:[#allocation2 + $0x88] sm:$0xff]
        %v474 = vld [vmem:[#allocation2 + $0x90] sm:$0xff]
        %v475 = vld [vmem:[#allocation2 + $0x98] sm:$0xff]
        %v476 = vld [vmem:[#allocation2 + $0xa0] sm:$0xff]
        %v477 = vld [vmem:[#allocation2 + $0xa8] sm:$0xff]
        %v478 = vld [vmem:[#allocation2 + $0xb0] sm:$0xff]
        %v479 = vld [vmem:[#allocation2 + $0xb8] sm:$0xff]
        %v480 = vld [vmem:[#allocation2 + $0xc0] sm:$0xff]
        %v481 = vld [vmem:[#allocation2 + $0xc8] sm:$0xff]
        %v482 = vld [vmem:[#allocation2 + $0xd0] sm:$0xff]
        %v483 = vld [vmem:[#allocation2 + $0xd8] sm:$0xff]
        %v484 = vld [vmem:[#allocation2 + $0xe0] sm:$0xff]
        %v485 = vld [vmem:[#allocation2 + $0xe8] sm:$0xff]
        %v486 = vld [vmem:[#allocation2 + $0xf0] sm:$0xff]
        %v487 = vld [vmem:[#allocation2 + $0xf8] sm:$0xff]
        %v488 = vld [vmem:[#allocation2 + $0x100] sm:$0xff]
        %v489 = vld [vmem:[#allocation2 + $0x108] sm:$0xff]
        %v490 = vld [vmem:[#allocation2 + $0x110] sm:$0xff]
        %v491 = vld [vmem:[#allocation2 + $0x118] sm:$0xff]
        %v492 = vld [vmem:[#allocation2 + $0x120] sm:$0xff]
        %v493 = vld [vmem:[#allocation2 + $0x128] sm:$0xff]
        %v494 = vld [vmem:[#allocation2 + $0x130] sm:$0xff]
        %v495 = vld [vmem:[#allocation2 + $0x138] sm:$0xff]
        %v496 = vld [vmem:[#allocation2 + $0x140] sm:$0xff]
        %v497 = vld [vmem:[#allocation2 + $0x148] sm:$0xff]
        %v498 = vld [vmem:[#allocation2 + $0x150] sm:$0xff]
        %v499 = vld [vmem:[#allocation2 + $0x158] sm:$0xff]
        %v500 = vld [vmem:[#allocation2 + $0x160] sm:$0xff]
        %v501 = vld [vmem:[#allocation2 + $0x168] sm:$0xff]
        %v502 = vld [vmem:[#allocation2 + $0x170] sm:$0xff]
        %v503 = vld [vmem:[#allocation2 + $0x178] sm:$0xff]
        %v504 = vld [vmem:[#allocation2 + $0x180] sm:$0xff]
        %v505 = vld [vmem:[#allocation2 + $0x188] sm:$0xff]
        %v506 = vld [vmem:[#allocation2 + $0x190] sm:$0xff]
        %v507 = vld [vmem:[#allocation2 + $0x198] sm:$0xff]
        %v508 = vld [vmem:[#allocation2 + $0x1a0] sm:$0xff]
        %v509 = vld [vmem:[#allocation2 + $0x1a8] sm:$0xff]
        %v510 = vld [vmem:[#allocation2 + $0x1b0] sm:$0xff]
        %v511 = vld [vmem:[#allocation2 + $0x1b8] sm:$0xff]
        %v512 = vld [vmem:[#allocation2 + $0x1c0] sm:$0xff]
        %v513 = vld [vmem:[#allocation2 + $0x1c8] sm:$0xff]
        %v514 = vld [vmem:[#allocation2 + $0x1d0] sm:$0xff]
        %v515 = vld [vmem:[#allocation2 + $0x1d8] sm:$0xff]
        %v516 = vld [vmem:[#allocation2 + $0x1e0] sm:$0xff]
        %v517 = vld [vmem:[#allocation2 + $0x1e8] sm:$0xff]
        %v518 = vld [vmem:[#allocation2 + $0x1f0] sm:$0xff]
        %v519 = vld [vmem:[#allocation2 + $0x1f8] sm:$0xff]
        %v520 = vld [vmem:[#allocation2 + $0x200] sm:$0xff]
        %v521 = vld [vmem:[#allocation2 + $0x208] sm:$0xff]
        %v522 = vld [vmem:[#allocation2 + $0x210] sm:$0xff]
        %v523 = vld [vmem:[#allocation2 + $0x218] sm:$0xff]
        %v524 = vld [vmem:[#allocation2 + $0x220] sm:$0xff]
        %v525 = vld [vmem:[#allocation2 + $0x228] sm:$0xff]
        %v526 = vld [vmem:[#allocation2 + $0x230] sm:$0xff]
        %v527 = vld [vmem:[#allocation2 + $0x238] sm:$0xff]
        %v528 = vld [vmem:[#allocation2 + $0x240] sm:$0xff]
        %v529 = vld [vmem:[#allocation2 + $0x248] sm:$0xff]
        %v530 = vld [vmem:[#allocation2 + $0x250] sm:$0xff]
        %v531 = vld [vmem:[#allocation2 + $0x258] sm:$0xff]
        %v532 = vld [vmem:[#allocation2 + $0x260] sm:$0xff]
        %v533 = vld [vmem:[#allocation2 + $0x268] sm:$0xff]
        %v534 = vld [vmem:[#allocation2 + $0x270] sm:$0xff]
        %v535 = vld [vmem:[#allocation2 + $0x278] sm:$0xff]
        %v536 = vld [vmem:[#allocation2 + $0x280] sm:$0xff]
        %v537 = vld [vmem:[#allocation2 + $0x288] sm:$0xff]
        %v538 = vld [vmem:[#allocation2 + $0x290] sm:$0xff]
        %v539 = vld [vmem:[#allocation2 + $0x298] sm:$0xff]
        %v540 = vld [vmem:[#allocation2 + $0x2a0] sm:$0xff]
        %v541 = vld [vmem:[#allocation2 + $0x2a8] sm:$0xff]
        %v542 = vld [vmem:[#allocation2 + $0x2b0] sm:$0xff]
        %v543 = vld [vmem:[#allocation2 + $0x2b8] sm:$0xff]
        %v544 = vld [vmem:[#allocation2 + $0x2c0] sm:$0xff]
        %v545 = vld [vmem:[#allocation2 + $0x2c8] sm:$0xff]
        %v546 = vld [vmem:[#allocation2 + $0x2d0] sm:$0xff]
        %v547 = vld [vmem:[#allocation2 + $0x2d8] sm:$0xff]
        %v548 = vld [vmem:[#allocation2 + $0x2e0] sm:$0xff]
        %v549 = vld [vmem:[#allocation2 + $0x2e8] sm:$0xff]
        %v550 = vld [vmem:[#allocation2 + $0x2f0] sm:$0xff]
        %v551 = vld [vmem:[#allocation2 + $0x2f8] sm:$0xff]
        %v552 = vld [vmem:[#allocation2 + $0x300] sm:$0xff]
        %v553 = vld [vmem:[#allocation2 + $0x308] sm:$0xff]
        %v554 = vld [vmem:[#allocation2 + $0x310] sm:$0xff]
        %v555 = vld [vmem:[#allocation2 + $0x318] sm:$0xff]
        %v556 = vld [vmem:[#allocation2 + $0x320] sm:$0xff]
        %v557 = vld [vmem:[#allocation2 + $0x328] sm:$0xff]
        %v558 = vld [vmem:[#allocation2 + $0x330] sm:$0xff]
        %v559 = vld [vmem:[#allocation2 + $0x338] sm:$0xff]
        %v560 = vld [vmem:[#allocation2 + $0x340] sm:$0xff]
        %v561 = vld [vmem:[#allocation2 + $0x348] sm:$0xff]
        %v562 = vld [vmem:[#allocation2 + $0x350] sm:$0xff]
        %v563 = vld [vmem:[#allocation2 + $0x358] sm:$0xff]
        %v564 = vld [vmem:[#allocation2 + $0x360] sm:$0xff]
        %v565 = vld [vmem:[#allocation2 + $0x368] sm:$0xff]
        %v566 = vld [vmem:[#allocation2 + $0x370] sm:$0xff]
        %v567 = vld [vmem:[#allocation2 + $0x378] sm:$0xff]
        %v568 = vld [vmem:[#allocation2 + $0x380] sm:$0xff]
        %v569 = vld [vmem:[#allocation2 + $0x388] sm:$0xff]
        %v570 = vld [vmem:[#allocation2 + $0x390] sm:$0xff]
        %v571 = vld [vmem:[#allocation2 + $0x398] sm:$0xff]
        %v572 = vld [vmem:[#allocation2 + $0x3a0] sm:$0xff]
        %v573 = vld [vmem:[#allocation2 + $0x3a8] sm:$0xff]
        %v574 = vld [vmem:[#allocation2 + $0x3b0] sm:$0xff]
        %v575 = vld [vmem:[#allocation2 + $0x3b8] sm:$0xff]
        %v576 = vld [vmem:[#allocation2 + $0x3c0] sm:$0xff]
        %v577 = vld [vmem:[#allocation2 + $0x3c8] sm:$0xff]
        %v578 = vld [vmem:[#allocation2 + $0x3d0] sm:$0xff]
        %v579 = vld [vmem:[#allocation2 + $0x3d8] sm:$0xff]
        %v580 = vld [vmem:[#allocation2 + $0x3e0] sm:$0xff]
        %v581 = vld [vmem:[#allocation2 + $0x3e8] sm:$0xff]
        %v582 = vld [vmem:[#allocation2 + $0x3f0] sm:$0xff]
        %v583 = vld [vmem:[#allocation2 + $0x3f8] sm:$0xff]
        %v584 = vld [vmem:[#allocation2 + $0x400] sm:$0xff]
        %v585 = vld [vmem:[#allocation2 + $0x408] sm:$0xff]
        %v586 = vld [vmem:[#allocation2 + $0x410] sm:$0xff]
        %v587 = vld [vmem:[#allocation2 + $0x418] sm:$0xff]
        %v588 = vld [vmem:[#allocation2 + $0x420] sm:$0xff]
        %v589 = vld [vmem:[#allocation2 + $0x428] sm:$0xff]
        %v590 = vld [vmem:[#allocation2 + $0x430] sm:$0xff]
        %v591 = vld [vmem:[#allocation2 + $0x438] sm:$0xff]
        %v592 = vld [vmem:[#allocation2 + $0x440] sm:$0xff]
        %v593 = vld [vmem:[#allocation2 + $0x448] sm:$0xff]
        %v594 = vld [vmem:[#allocation2 + $0x450] sm:$0xff]
        %v595 = vld [vmem:[#allocation2 + $0x458] sm:$0xff]
        %v596 = vld [vmem:[#allocation2 + $0x460] sm:$0xff]
        %v597 = vld [vmem:[#allocation2 + $0x468] sm:$0xff]
        %v598 = vld [vmem:[#allocation2 + $0x470] sm:$0xff]
        %v599 = vld [vmem:[#allocation2 + $0x478] sm:$0xff]
        %v600 = vld [vmem:[#allocation2 + $0x480] sm:$0xff]
        %v601 = vld [vmem:[#allocation2 + $0x488] sm:$0xff]
        %v602 = vld [vmem:[#allocation2 + $0x490] sm:$0xff]
        %v603 = vld [vmem:[#allocation2 + $0x498] sm:$0xff]
        %v604 = vld [vmem:[#allocation2 + $0x4a0] sm:$0xff]
        %v605 = vld [vmem:[#allocation2 + $0x4a8] sm:$0xff]
        %v606 = vld [vmem:[#allocation2 + $0x4b0] sm:$0xff]
        %v607 = vld [vmem:[#allocation2 + $0x4b8] sm:$0xff]
        %v608 = vld [vmem:[#allocation2 + $0x4c0] sm:$0xff]
        %v609 = vld [vmem:[#allocation2 + $0x4c8] sm:$0xff]
        %v610 = vld [vmem:[#allocation2 + $0x4d0] sm:$0xff]
        %v611 = vld [vmem:[#allocation2 + $0x4d8] sm:$0xff]
        %v612 = vld [vmem:[#allocation2 + $0x4e0] sm:$0xff]
        %v613 = vld [vmem:[#allocation2 + $0x4e8] sm:$0xff]
        %v614 = vld [vmem:[#allocation2 + $0x4f0] sm:$0xff]
        %v615 = vld [vmem:[#allocation2 + $0x4f8] sm:$0xff]
        %v616 = vld [vmem:[#allocation2 + $0x500] sm:$0xff]
        %v617 = vld [vmem:[#allocation2 + $0x508] sm:$0xff]
        %v618 = vld [vmem:[#allocation2 + $0x510] sm:$0xff]
        %v619 = vld [vmem:[#allocation2 + $0x518] sm:$0xff]
        %v620 = vld [vmem:[#allocation2 + $0x520] sm:$0xff]
        %v621 = vld [vmem:[#allocation2 + $0x528] sm:$0xff]
        %v622 = vld [vmem:[#allocation2 + $0x530] sm:$0xff]
        %v623 = vld [vmem:[#allocation2 + $0x538] sm:$0xff]
        %v624 = vld [vmem:[#allocation2 + $0x540] sm:$0xff]
        %v625 = vld [vmem:[#allocation2 + $0x548] sm:$0xff]
        %v626 = vld [vmem:[#allocation2 + $0x550] sm:$0xff]
        %v627 = vld [vmem:[#allocation2 + $0x558] sm:$0xff]
        %v628 = vld [vmem:[#allocation2 + $0x560] sm:$0xff]
        %v629 = vld [vmem:[#allocation2 + $0x568] sm:$0xff]
        %v630 = vld [vmem:[#allocation2 + $0x570] sm:$0xff]
        %v631 = vld [vmem:[#allocation2 + $0x578] sm:$0xff]
        %v632 = vld [vmem:[#allocation2 + $0x580] sm:$0xff]
        %v633 = vld [vmem:[#allocation2 + $0x588] sm:$0xff]
        %v634 = vld [vmem:[#allocation2 + $0x590] sm:$0xff]
        %v635 = vld [vmem:[#allocation2 + $0x598] sm:$0xff]
        %v636 = vld [vmem:[#allocation2 + $0x5a0] sm:$0xff]
        %v637 = vld [vmem:[#allocation2 + $0x5a8] sm:$0xff]
        %v638 = vld [vmem:[#allocation2 + $0x5b0] sm:$0xff]
        %v639 = vld [vmem:[#allocation2 + $0x5b8] sm:$0xff]
        %v640 = vld [vmem:[#allocation2 + $0x5c0] sm:$0xff]
        %v641 = vld [vmem:[#allocation2 + $0x5c8] sm:$0xff]
        %v642 = vld [vmem:[#allocation2 + $0x5d0] sm:$0xff]
        %v643 = vld [vmem:[#allocation2 + $0x5d8] sm:$0xff]
        %v644 = vld [vmem:[#allocation2 + $0x5e0] sm:$0xff]
        %v645 = vld [vmem:[#allocation2 + $0x5e8] sm:$0xff]
        %v646 = vld [vmem:[#allocation2 + $0x5f0] sm:$0xff]
        %v647 = vld [vmem:[#allocation2 + $0x5f8] sm:$0xff]
        %v648 = vld [vmem:[#allocation2 + $0x600] sm:$0xff]
        %v649 = vld [vmem:[#allocation2 + $0x608] sm:$0xff]
        %v650 = vld [vmem:[#allocation2 + $0x610] sm:$0xff]
        %v651 = vld [vmem:[#allocation2 + $0x618] sm:$0xff]
        %v652 = vld [vmem:[#allocation2 + $0x620] sm:$0xff]
        %v653 = vld [vmem:[#allocation2 + $0x628] sm:$0xff]
        %v654 = vld [vmem:[#allocation2 + $0x630] sm:$0xff]
        %v655 = vld [vmem:[#allocation2 + $0x638] sm:$0xff]
        %v656 = vld [vmem:[#allocation2 + $0x640] sm:$0xff]
        %v657 = vld [vmem:[#allocation2 + $0x648] sm:$0xff]
        %v658 = vld [vmem:[#allocation2 + $0x650] sm:$0xff]
        %v659 = vld [vmem:[#allocation2 + $0x658] sm:$0xff]
        %v660 = vld [vmem:[#allocation2 + $0x660] sm:$0xff]
        %v661 = vld [vmem:[#allocation2 + $0x668] sm:$0xff]
        %v662 = vld [vmem:[#allocation2 + $0x670] sm:$0xff]
        %v663 = vld [vmem:[#allocation2 + $0x678] sm:$0xff]
        %v664 = vld [vmem:[#allocation2 + $0x680] sm:$0xff]
        %v665 = vld [vmem:[#allocation2 + $0x688] sm:$0xff]
        %v666 = vld [vmem:[#allocation2 + $0x690] sm:$0xff]
        %v667 = vld [vmem:[#allocation2 + $0x698] sm:$0xff]
        %v668 = vld [vmem:[#allocation2 + $0x6a0] sm:$0xff]
        %v669 = vld [vmem:[#allocation2 + $0x6a8] sm:$0xff]
        %v670 = vld [vmem:[#allocation2 + $0x6b0] sm:$0xff]
        %v671 = vld [vmem:[#allocation2 + $0x6b8] sm:$0xff]
        %v672 = vld [vmem:[#allocation2 + $0x6c0] sm:$0xff]
        %v673 = vld [vmem:[#allocation2 + $0x6c8] sm:$0xff]
        %v674 = vld [vmem:[#allocation2 + $0x6d0] sm:$0xff]
        %v675 = vld [vmem:[#allocation2 + $0x6d8] sm:$0xff]
        %v676 = vld [vmem:[#allocation2 + $0x6e0] sm:$0xff]
        %v677 = vld [vmem:[#allocation2 + $0x6e8] sm:$0xff]
        %v678 = vld [vmem:[#allocation2 + $0x6f0] sm:$0xff]
        %v679 = vld [vmem:[#allocation2 + $0x6f8] sm:$0xff]
        %v680 = vld [vmem:[#allocation2 + $0x700] sm:$0xff]
        %v681 = vld [vmem:[#allocation2 + $0x708] sm:$0xff]
        %v682 = vld [vmem:[#allocation2 + $0x710] sm:$0xff]
        %v683 = vld [vmem:[#allocation2 + $0x718] sm:$0xff]
        %v684 = vld [vmem:[#allocation2 + $0x720] sm:$0xff]
        %v685 = vld [vmem:[#allocation2 + $0x728] sm:$0xff]
        %v686 = vld [vmem:[#allocation2 + $0x730] sm:$0xff]
        %v687 = vld [vmem:[#allocation2 + $0x738] sm:$0xff]
        %v688 = vld [vmem:[#allocation2 + $0x740] sm:$0xff]
        %v689 = vld [vmem:[#allocation2 + $0x748] sm:$0xff]
        %v690 = vld [vmem:[#allocation2 + $0x750] sm:$0xff]
        %v691 = vld [vmem:[#allocation2 + $0x758] sm:$0xff]
        %v692 = vld [vmem:[#allocation2 + $0x760] sm:$0xff]
        %v693 = vld [vmem:[#allocation2 + $0x768] sm:$0xff]
        %v694 = vld [vmem:[#allocation2 + $0x770] sm:$0xff]
        %v695 = vld [vmem:[#allocation2 + $0x778] sm:$0xff]
        %v696 = vld [vmem:[#allocation2 + $0x780] sm:$0xff]
        %v697 = vld [vmem:[#allocation2 + $0x788] sm:$0xff]
        %v698 = vld [vmem:[#allocation2 + $0x790] sm:$0xff]
        %v699 = vld [vmem:[#allocation2 + $0x798] sm:$0xff]
        %v700 = vld [vmem:[#allocation2 + $0x7a0] sm:$0xff]
        %v701 = vld [vmem:[#allocation2 + $0x7a8] sm:$0xff]
        %v702 = vld [vmem:[#allocation2 + $0x7b0] sm:$0xff]
        %v703 = vld [vmem:[#allocation2 + $0x7b8] sm:$0xff]
        %v704 = vld [vmem:[#allocation2 + $0x7c0] sm:$0xff]
        %v705 = vld [vmem:[#allocation2 + $0x7c8] sm:$0xff]
        %v706 = vld [vmem:[#allocation2 + $0x7d0] sm:$0xff]
        %v707 = vld [vmem:[#allocation2 + $0x7d8] sm:$0xff]
        %v708 = vld [vmem:[#allocation2 + $0x7e0] sm:$0xff]
        %v709 = vld [vmem:[#allocation2 + $0x7e8] sm:$0xff]
        %v710 = vld [vmem:[#allocation2 + $0x7f0] sm:$0xff]
        %v711 = vld [vmem:[#allocation2 + $0x7f8] sm:$0xff]
        %v712 = vld [vmem:[%s2] sm:$0xff]
        %v714 = vlaneseq
        %v715 = vshrl.u32 %v714, 7
        %v716 = vsub.s32 0, %v715
        %v717 = vrot.slane %v712, %v716
        %v718 = vlaneseq
        %v719 = vshrl.u32 %v718, 7
        %v720 = vsub.s32 1, %v719
        %v721 = vrot.slane %v712, %v720
        %v722 = vlaneseq
        %v723 = vshrl.u32 %v722, 7
        %v724 = vsub.s32 2, %v723
        %v725 = vrot.slane %v712, %v724
        %v726 = vlaneseq
        %v727 = vshrl.u32 %v726, 7
        %v728 = vsub.s32 3, %v727
        %v729 = vrot.slane %v712, %v728
        %v730 = vlaneseq
        %v731 = vshrl.u32 %v730, 7
        %v732 = vsub.s32 4, %v731
        %v733 = vrot.slane %v712, %v732
        %v734 = vlaneseq
        %v735 = vshrl.u32 %v734, 7
        %v736 = vsub.s32 5, %v735
        %v737 = vrot.slane %v712, %v736
        %v738 = vlaneseq
        %v739 = vshrl.u32 %v738, 7
        %v740 = vsub.s32 6, %v739
        %v741 = vrot.slane %v712, %v740
        %v742 = vlaneseq
        %v743 = vshrl.u32 %v742, 7
        %v744 = vsub.s32 7, %v743
        %v745 = vrot.slane %v712, %v744
        %754 = vmatprep.subr.mxu0 %v457
        %755 = vmatpush1.msra.mxu0 %v456
        %756 = vmatprep.subr.mxu0 %v465
        %757 = vmatpush1.msra.mxu0 %v464
        %758 = vmatprep.subr.mxu0 %v473
        %759 = vmatpush1.msra.mxu0 %v472
        %760 = vmatprep.subr.mxu0 %v481
        %761 = vmatpush1.msra.mxu0 %v480
        %762 = vmatprep.subr.mxu0 %v489
        %763 = vmatpush1.msra.mxu0 %v488
        %764 = vmatprep.subr.mxu0 %v497
        %765 = vmatpush1.msra.mxu0 %v496
        %766 = vmatprep.subr.mxu0 %v505
        %767 = vmatpush1.msra.mxu0 %v504
        %768 = vmatprep.subr.mxu0 %v513
        %769 = vmatpush1.msra.mxu0 %v512
        %770 = vmatprep.subr.mxu0 %v521
        %771 = vmatpush1.msra.mxu0 %v520
        %772 = vmatprep.subr.mxu0 %v529
        %773 = vmatpush1.msra.mxu0 %v528
        %774 = vmatprep.subr.mxu0 %v537
        %775 = vmatpush1.msra.mxu0 %v536
        %776 = vmatprep.subr.mxu0 %v545
        %777 = vmatpush1.msra.mxu0 %v544
        %778 = vmatprep.subr.mxu0 %v553
        %779 = vmatpush1.msra.mxu0 %v552
        %780 = vmatprep.subr.mxu0 %v561
        %781 = vmatpush1.msra.mxu0 %v560
        %782 = vmatprep.subr.mxu0 %v569
        %783 = vmatpush1.msra.mxu0 %v568
        %784 = vmatprep.subr.mxu0 %v577
        %785 = vmatpush1.msra.mxu0 %v576
        %786 = vmatprep.subr.mxu0 %v585
        %787 = vmatpush1.msra.mxu0 %v584
        %788 = vmatprep.subr.mxu0 %v593
        %789 = vmatpush1.msra.mxu0 %v592
        %790 = vmatprep.subr.mxu0 %v601
        %791 = vmatpush1.msra.mxu0 %v600
        %792 = vmatprep.subr.mxu0 %v609
        %793 = vmatpush1.msra.mxu0 %v608
        %794 = vmatprep.subr.mxu0 %v617
        %795 = vmatpush1.msra.mxu0 %v616
        %796 = vmatprep.subr.mxu0 %v625
        %797 = vmatpush1.msra.mxu0 %v624
        %798 = vmatprep.subr.mxu0 %v633
        %799 = vmatpush1.msra.mxu0 %v632
        %800 = vmatprep.subr.mxu0 %v641
        %801 = vmatpush1.msra.mxu0 %v640
        %802 = vmatprep.subr.mxu0 %v649
        %803 = vmatpush1.msra.mxu0 %v648
        %804 = vmatprep.subr.mxu0 %v657
        %805 = vmatpush1.msra.mxu0 %v656
        %806 = vmatprep.subr.mxu0 %v665
        %807 = vmatpush1.msra.mxu0 %v664
        %808 = vmatprep.subr.mxu0 %v673
        %809 = vmatpush1.msra.mxu0 %v672
        %810 = vmatprep.subr.mxu0 %v681
        %811 = vmatpush1.msra.mxu0 %v680
        %812 = vmatprep.subr.mxu0 %v689
        %813 = vmatpush1.msra.mxu0 %v688
        %814 = vmatprep.subr.mxu0 %v697
        %815 = vmatpush1.msra.mxu0 %v696
        %816 = vmatprep.subr.mxu0 %v705
        %817 = vmatpush1.msra.mxu0 %v704
        %818 = vmatprep.mubr.f32.mxu0 %v455
        %819 = vmatmul.mubr.f32.gmra.mrb[0].mxu0 %v454
        %v820 = vpop.f32.mrb[0].mxu0
        %v821 = vadd.f32 %v717, %v820
        %v822 = vpop.f32.mrb[0].mxu0
        %v823 = vadd.f32 %v721, %v822
        %824 = vdwg.mxu0
        %825 = vmatprep.subr.mxu0 %v459
        %826 = vmatpush1.msra.mxu0 %v458
        %827 = vmatprep.subr.mxu0 %v467
        %828 = vmatpush1.msra.mxu0 %v466
        %829 = vmatprep.subr.mxu0 %v475
        %830 = vmatpush1.msra.mxu0 %v474
        %831 = vmatprep.subr.mxu0 %v483
        %832 = vmatpush1.msra.mxu0 %v482
        %833 = vmatprep.subr.mxu0 %v491
        %834 = vmatpush1.msra.mxu0 %v490
        %835 = vmatprep.subr.mxu0 %v499
        %836 = vmatpush1.msra.mxu0 %v498
        %837 = vmatprep.subr.mxu0 %v507
        %838 = vmatpush1.msra.mxu0 %v506
        %839 = vmatprep.subr.mxu0 %v515
        %840 = vmatpush1.msra.mxu0 %v514
        %841 = vmatprep.subr.mxu0 %v523
        %842 = vmatpush1.msra.mxu0 %v522
        %843 = vmatprep.subr.mxu0 %v531
        %844 = vmatpush1.msra.mxu0 %v530
        %845 = vmatprep.subr.mxu0 %v539
        %846 = vmatpush1.msra.mxu0 %v538
        %847 = vmatprep.subr.mxu0 %v547
        %848 = vmatpush1.msra.mxu0 %v546
        %849 = vmatprep.subr.mxu0 %v555
        %850 = vmatpush1.msra.mxu0 %v554
        %851 = vmatprep.subr.mxu0 %v563
        %852 = vmatpush1.msra.mxu0 %v562
        %853 = vmatprep.subr.mxu0 %v571
        %854 = vmatpush1.msra.mxu0 %v570
        %855 = vmatprep.subr.mxu0 %v579
        %856 = vmatpush1.msra.mxu0 %v578
        %857 = vmatprep.subr.mxu0 %v587
        %858 = vmatpush1.msra.mxu0 %v586
        %859 = vmatprep.subr.mxu0 %v595
        %860 = vmatpush1.msra.mxu0 %v594
        %861 = vmatprep.subr.mxu0 %v603
        %862 = vmatpush1.msra.mxu0 %v602
        %863 = vmatprep.subr.mxu0 %v611
        %864 = vmatpush1.msra.mxu0 %v610
        %865 = vmatprep.subr.mxu0 %v619
        %866 = vmatpush1.msra.mxu0 %v618
        %867 = vmatprep.subr.mxu0 %v627
        %868 = vmatpush1.msra.mxu0 %v626
        %869 = vmatprep.subr.mxu0 %v635
        %870 = vmatpush1.msra.mxu0 %v634
        %871 = vmatprep.subr.mxu0 %v643
        %872 = vmatpush1.msra.mxu0 %v642
        %873 = vmatprep.subr.mxu0 %v651
        %874 = vmatpush1.msra.mxu0 %v650
        %875 = vmatprep.subr.mxu0 %v659
        %876 = vmatpush1.msra.mxu0 %v658
        %877 = vmatprep.subr.mxu0 %v667
        %878 = vmatpush1.msra.mxu0 %v666
        %879 = vmatprep.subr.mxu0 %v675
        %880 = vmatpush1.msra.mxu0 %v674
        %881 = vmatprep.subr.mxu0 %v683
        %882 = vmatpush1.msra.mxu0 %v682
        %883 = vmatprep.subr.mxu0 %v691
        %884 = vmatpush1.msra.mxu0 %v690
        %885 = vmatprep.subr.mxu0 %v699
        %886 = vmatpush1.msra.mxu0 %v698
        %887 = vmatprep.subr.mxu0 %v707
        %888 = vmatpush1.msra.mxu0 %v706
        %889 = vmatprep.mubr.f32.mxu0 %v455
        %890 = vmatmul.mubr.f32.gmra.mrb[0].mxu0 %v454
        %v891 = vpop.f32.mrb[0].mxu0
        %v892 = vadd.f32 %v725, %v891
        %v893 = vpop.f32.mrb[0].mxu0
        %v894 = vadd.f32 %v729, %v893
        %895 = vdwg.mxu0
        %896 = vmatprep.subr.mxu0 %v461
        %897 = vmatpush1.msra.mxu0 %v460
        %898 = vmatprep.subr.mxu0 %v469
        %899 = vmatpush1.msra.mxu0 %v468
        %900 = vmatprep.subr.mxu0 %v477
        %901 = vmatpush1.msra.mxu0 %v476
        %902 = vmatprep.subr.mxu0 %v485
        %903 = vmatpush1.msra.mxu0 %v484
        %904 = vmatprep.subr.mxu0 %v493
        %905 = vmatpush1.msra.mxu0 %v492
        %906 = vmatprep.subr.mxu0 %v501
        %907 = vmatpush1.msra.mxu0 %v500
        %908 = vmatprep.subr.mxu0 %v509
        %909 = vmatpush1.msra.mxu0 %v508
        %910 = vmatprep.subr.mxu0 %v517
        %911 = vmatpush1.msra.mxu0 %v516
        %912 = vmatprep.subr.mxu0 %v525
        %913 = vmatpush1.msra.mxu0 %v524
        %914 = vmatprep.subr.mxu0 %v533
        %915 = vmatpush1.msra.mxu0 %v532
        %916 = vmatprep.subr.mxu0 %v541
        %917 = vmatpush1.msra.mxu0 %v540
        %918 = vmatprep.subr.mxu0 %v549
        %919 = vmatpush1.msra.mxu0 %v548
        %920 = vmatprep.subr.mxu0 %v557
        %921 = vmatpush1.msra.mxu0 %v556
        %922 = vmatprep.subr.mxu0 %v565
        %923 = vmatpush1.msra.mxu0 %v564
        %924 = vmatprep.subr.mxu0 %v573
        %925 = vmatpush1.msra.mxu0 %v572
        %926 = vmatprep.subr.mxu0 %v581
        %927 = vmatpush1.msra.mxu0 %v580
        %928 = vmatprep.subr.mxu0 %v589
        %929 = vmatpush1.msra.mxu0 %v588
        %930 = vmatprep.subr.mxu0 %v597
        %931 = vmatpush1.msra.mxu0 %v596
        %932 = vmatprep.subr.mxu0 %v605
        %933 = vmatpush1.msra.mxu0 %v604
        %934 = vmatprep.subr.mxu0 %v613
        %935 = vmatpush1.msra.mxu0 %v612
        %936 = vmatprep.subr.mxu0 %v621
        %937 = vmatpush1.msra.mxu0 %v620
        %938 = vmatprep.subr.mxu0 %v629
        %939 = vmatpush1.msra.mxu0 %v628
        %940 = vmatprep.subr.mxu0 %v637
        %941 = vmatpush1.msra.mxu0 %v636
        %942 = vmatprep.subr.mxu0 %v645
        %943 = vmatpush1.msra.mxu0 %v644
        %944 = vmatprep.subr.mxu0 %v653
        %945 = vmatpush1.msra.mxu0 %v652
        %946 = vmatprep.subr.mxu0 %v661
        %947 = vmatpush1.msra.mxu0 %v660
        %948 = vmatprep.subr.mxu0 %v669
        %949 = vmatpush1.msra.mxu0 %v668
        %950 = vmatprep.subr.mxu0 %v677
        %951 = vmatpush1.msra.mxu0 %v676
        %952 = vmatprep.subr.mxu0 %v685
        %953 = vmatpush1.msra.mxu0 %v684
        %954 = vmatprep.subr.mxu0 %v693
        %955 = vmatpush1.msra.mxu0 %v692
        %956 = vmatprep.subr.mxu0 %v701
        %957 = vmatpush1.msra.mxu0 %v700
        %958 = vmatprep.subr.mxu0 %v709
        %959 = vmatpush1.msra.mxu0 %v708
        %960 = vmatprep.mubr.f32.mxu0 %v455
        %961 = vmatmul.mubr.f32.gmra.mrb[0].mxu0 %v454
        %v962 = vpop.f32.mrb[0].mxu0
        %v963 = vadd.f32 %v733, %v962
        %v964 = vpop.f32.mrb[0].mxu0
        %v965 = vadd.f32 %v737, %v964
        %966 = vdwg.mxu0
        %967 = vmatprep.subr.mxu0 %v463
        %968 = vmatpush1.msra.mxu0 %v462
        %969 = vmatprep.subr.mxu0 %v471
        %970 = vmatpush1.msra.mxu0 %v470
        %971 = vmatprep.subr.mxu0 %v479
        %972 = vmatpush1.msra.mxu0 %v478
        %973 = vmatprep.subr.mxu0 %v487
        %974 = vmatpush1.msra.mxu0 %v486
        %975 = vmatprep.subr.mxu0 %v495
        %976 = vmatpush1.msra.mxu0 %v494
        %977 = vmatprep.subr.mxu0 %v503
        %978 = vmatpush1.msra.mxu0 %v502
        %979 = vmatprep.subr.mxu0 %v511
        %980 = vmatpush1.msra.mxu0 %v510
        %981 = vmatprep.subr.mxu0 %v519
        %982 = vmatpush1.msra.mxu0 %v518
        %983 = vmatprep.subr.mxu0 %v527
        %984 = vmatpush1.msra.mxu0 %v526
        %985 = vmatprep.subr.mxu0 %v535
        %986 = vmatpush1.msra.mxu0 %v534
        %987 = vmatprep.subr.mxu0 %v543
        %988 = vmatpush1.msra.mxu0 %v542
        %989 = vmatprep.subr.mxu0 %v551
        %990 = vmatpush1.msra.mxu0 %v550
        %991 = vmatprep.subr.mxu0 %v559
        %992 = vmatpush1.msra.mxu0 %v558
        %993 = vmatprep.subr.mxu0 %v567
        %994 = vmatpush1.msra.mxu0 %v566
        %995 = vmatprep.subr.mxu0 %v575
        %996 = vmatpush1.msra.mxu0 %v574
        %997 = vmatprep.subr.mxu0 %v583
        %998 = vmatpush1.msra.mxu0 %v582
        %999 = vmatprep.subr.mxu0 %v591
        %1000 = vmatpush1.msra.mxu0 %v590
        %1001 = vmatprep.subr.mxu0 %v599
        %1002 = vmatpush1.msra.mxu0 %v598
        %1003 = vmatprep.subr.mxu0 %v607
        %1004 = vmatpush1.msra.mxu0 %v606
        %1005 = vmatprep.subr.mxu0 %v615
        %1006 = vmatpush1.msra.mxu0 %v614
        %1007 = vmatprep.subr.mxu0 %v623
        %1008 = vmatpush1.msra.mxu0 %v622
        %1009 = vmatprep.subr.mxu0 %v631
        %1010 = vmatpush1.msra.mxu0 %v630
        %1011 = vmatprep.subr.mxu0 %v639
        %1012 = vmatpush1.msra.mxu0 %v638
        %1013 = vmatprep.subr.mxu0 %v647
        %1014 = vmatpush1.msra.mxu0 %v646
        %1015 = vmatprep.subr.mxu0 %v655
        %1016 = vmatpush1.msra.mxu0 %v654
        %1017 = vmatprep.subr.mxu0 %v663
        %1018 = vmatpush1.msra.mxu0 %v662
        %1019 = vmatprep.subr.mxu0 %v671
        %1020 = vmatpush1.msra.mxu0 %v670
        %1021 = vmatprep.subr.mxu0 %v679
        %1022 = vmatpush1.msra.mxu0 %v678
        %1023 = vmatprep.subr.mxu0 %v687
        %1024 = vmatpush1.msra.mxu0 %v686
        %1025 = vmatprep.subr.mxu0 %v695
        %1026 = vmatpush1.msra.mxu0 %v694
        %1027 = vmatprep.subr.mxu0 %v703
        %1028 = vmatpush1.msra.mxu0 %v702
        %1029 = vmatprep.subr.mxu0 %v711
        %1030 = vmatpush1.msra.mxu0 %v710
        %1031 = vmatprep.mubr.f32.mxu0 %v455
        %1032 = vmatmul.mubr.f32.gmra.mrb[0].mxu0 %v454
        %v1033 = vpop.f32.mrb[0].mxu0
        %v1034 = vadd.f32 %v741, %v1033
        %v1035 = vpop.f32.mrb[0].mxu0
        %v1036 = vadd.f32 %v745, %v1035
        %1037 = vdwg.mxu0
        %v1038 = vmax.f32 %v821, 0.0
        %v1039 = vmax.f32 %v823, 0.0
        %v1040 = vmax.f32 %v892, 0.0
        %v1041 = vmax.f32 %v894, 0.0
        %v1042 = vmax.f32 %v963, 0.0
        %v1043 = vmax.f32 %v965, 0.0
        %v1044 = vmax.f32 %v1034, 0.0
        %v1045 = vmax.f32 %v1036, 0.0
        %v1046 = vmax.f32 %v1038, %v1040
        %v1047 = vmax.f32 %v1039, %v1041
        %v1048 = vmax.f32 %v1042, %v1044
        %v1049 = vmax.f32 %v1043, %v1045
        %v1050 = vmax.f32 %v1046, %v1048
        %v1051 = vmax.f32 %v1047, %v1049
        %v1052 = vld [vmem:[%s3] sm:$0xff]
        %v1053 = vld [vmem:[%s3 + $0x8] sm:$0xff]
        %v1054 = vld [vmem:[%s3 + $0x10] sm:$0xff]
        %v1055 = vld [vmem:[%s3 + $0x18] sm:$0xff]
        %v1056 = vld [vmem:[%s3 + $0x20] sm:$0xff]
        %v1057 = vld [vmem:[%s3 + $0x28] sm:$0xff]
        %v1058 = vld [vmem:[%s3 + $0x30] sm:$0xff]
        %v1059 = vld [vmem:[%s3 + $0x38] sm:$0xff]
        %v1060 = vld [vmem:[%s3 + $0x40] sm:$0xff]
        %v1061 = vld [vmem:[%s3 + $0x48] sm:$0xff]
        %v1062 = vld [vmem:[%s3 + $0x50] sm:$0xff]
        %v1063 = vld [vmem:[%s3 + $0x58] sm:$0xff]
        %v1064 = vld [vmem:[%s3 + $0x60] sm:$0xff]
        %v1065 = vld [vmem:[%s3 + $0x68] sm:$0xff]
        %v1066 = vld [vmem:[%s3 + $0x70] sm:$0xff]
        %v1067 = vld [vmem:[%s3 + $0x78] sm:$0xff]
        %v1068 = vld [vmem:[%s3 + $0x80] sm:$0xff]
        %v1069 = vld [vmem:[%s3 + $0x88] sm:$0xff]
        %v1070 = vld [vmem:[%s3 + $0x90] sm:$0xff]
        %v1071 = vld [vmem:[%s3 + $0x98] sm:$0xff]
        %v1072 = vld [vmem:[%s3 + $0xa0] sm:$0xff]
        %v1073 = vld [vmem:[%s3 + $0xa8] sm:$0xff]
        %v1074 = vld [vmem:[%s3 + $0xb0] sm:$0xff]
        %v1075 = vld [vmem:[%s3 + $0xb8] sm:$0xff]
        %v1076 = vld [vmem:[%s3 + $0xc0] sm:$0xff]
        %v1077 = vld [vmem:[%s3 + $0xc8] sm:$0xff]
        %v1078 = vld [vmem:[%s3 + $0xd0] sm:$0xff]
        %v1079 = vld [vmem:[%s3 + $0xd8] sm:$0xff]
        %v1080 = vld [vmem:[%s3 + $0xe0] sm:$0xff]
        %v1081 = vld [vmem:[%s3 + $0xe8] sm:$0xff]
        %v1082 = vld [vmem:[%s3 + $0xf0] sm:$0xff]
        %v1083 = vld [vmem:[%s3 + $0xf8] sm:$0xff]
        %v1084 = vld [vmem:[%s3 + $0x100] sm:$0xff]
        %v1085 = vld [vmem:[%s3 + $0x108] sm:$0xff]
        %v1086 = vld [vmem:[%s3 + $0x110] sm:$0xff]
        %v1087 = vld [vmem:[%s3 + $0x118] sm:$0xff]
        %v1088 = vld [vmem:[%s3 + $0x120] sm:$0xff]
        %v1089 = vld [vmem:[%s3 + $0x128] sm:$0xff]
        %v1090 = vld [vmem:[%s3 + $0x130] sm:$0xff]
        %v1091 = vld [vmem:[%s3 + $0x138] sm:$0xff]
        %v1092 = vld [vmem:[%s3 + $0x140] sm:$0xff]
        %v1093 = vld [vmem:[%s3 + $0x148] sm:$0xff]
        %v1094 = vld [vmem:[%s3 + $0x150] sm:$0xff]
        %v1095 = vld [vmem:[%s3 + $0x158] sm:$0xff]
        %v1096 = vld [vmem:[%s3 + $0x160] sm:$0xff]
        %v1097 = vld [vmem:[%s3 + $0x168] sm:$0xff]
        %v1098 = vld [vmem:[%s3 + $0x170] sm:$0xff]
        %v1099 = vld [vmem:[%s3 + $0x178] sm:$0xff]
        %v1100 = vld [vmem:[%s3 + $0x180] sm:$0xff]
        %v1101 = vld [vmem:[%s3 + $0x188] sm:$0xff]
        %v1102 = vld [vmem:[%s3 + $0x190] sm:$0xff]
        %v1103 = vld [vmem:[%s3 + $0x198] sm:$0xff]
        %v1104 = vld [vmem:[%s3 + $0x1a0] sm:$0xff]
        %v1105 = vld [vmem:[%s3 + $0x1a8] sm:$0xff]
        %v1106 = vld [vmem:[%s3 + $0x1b0] sm:$0xff]
        %v1107 = vld [vmem:[%s3 + $0x1b8] sm:$0xff]
        %v1108 = vld [vmem:[%s3 + $0x1c0] sm:$0xff]
        %v1109 = vld [vmem:[%s3 + $0x1c8] sm:$0xff]
        %v1110 = vld [vmem:[%s3 + $0x1d0] sm:$0xff]
        %v1111 = vld [vmem:[%s3 + $0x1d8] sm:$0xff]
        %v1112 = vld [vmem:[%s3 + $0x1e0] sm:$0xff]
        %v1113 = vld [vmem:[%s3 + $0x1e8] sm:$0xff]
        %v1114 = vld [vmem:[%s3 + $0x1f0] sm:$0xff]
        %v1115 = vld [vmem:[%s3 + $0x1f8] sm:$0xff]
        %v1116 = vld [vmem:[%s3 + $0x200] sm:$0xff]
        %v1117 = vld [vmem:[%s3 + $0x208] sm:$0xff]
        %v1118 = vld [vmem:[%s3 + $0x210] sm:$0xff]
        %v1119 = vld [vmem:[%s3 + $0x218] sm:$0xff]
        %v1120 = vld [vmem:[%s3 + $0x220] sm:$0xff]
        %v1121 = vld [vmem:[%s3 + $0x228] sm:$0xff]
        %v1122 = vld [vmem:[%s3 + $0x230] sm:$0xff]
        %v1123 = vld [vmem:[%s3 + $0x238] sm:$0xff]
        %v1124 = vld [vmem:[%s3 + $0x240] sm:$0xff]
        %v1125 = vld [vmem:[%s3 + $0x248] sm:$0xff]
        %v1126 = vld [vmem:[%s3 + $0x250] sm:$0xff]
        %v1127 = vld [vmem:[%s3 + $0x258] sm:$0xff]
        %v1128 = vld [vmem:[%s3 + $0x260] sm:$0xff]
        %v1129 = vld [vmem:[%s3 + $0x268] sm:$0xff]
        %v1130 = vld [vmem:[%s3 + $0x270] sm:$0xff]
        %v1131 = vld [vmem:[%s3 + $0x278] sm:$0xff]
        %v1132 = vld [vmem:[%s3 + $0x280] sm:$0xff]
        %v1133 = vld [vmem:[%s3 + $0x288] sm:$0xff]
        %v1134 = vld [vmem:[%s3 + $0x290] sm:$0xff]
        %v1135 = vld [vmem:[%s3 + $0x298] sm:$0xff]
        %v1136 = vld [vmem:[%s3 + $0x2a0] sm:$0xff]
        %v1137 = vld [vmem:[%s3 + $0x2a8] sm:$0xff]
        %v1138 = vld [vmem:[%s3 + $0x2b0] sm:$0xff]
        %v1139 = vld [vmem:[%s3 + $0x2b8] sm:$0xff]
        %v1140 = vld [vmem:[%s3 + $0x2c0] sm:$0xff]
        %v1141 = vld [vmem:[%s3 + $0x2c8] sm:$0xff]
        %v1142 = vld [vmem:[%s3 + $0x2d0] sm:$0xff]
        %v1143 = vld [vmem:[%s3 + $0x2d8] sm:$0xff]
        %v1144 = vld [vmem:[%s3 + $0x2e0] sm:$0xff]
        %v1145 = vld [vmem:[%s3 + $0x2e8] sm:$0xff]
        %v1146 = vld [vmem:[%s3 + $0x2f0] sm:$0xff]
        %v1147 = vld [vmem:[%s3 + $0x2f8] sm:$0xff]
        %v1148 = vld [vmem:[%s3 + $0x300] sm:$0xff]
        %v1149 = vld [vmem:[%s3 + $0x308] sm:$0xff]
        %v1150 = vld [vmem:[%s3 + $0x310] sm:$0xff]
        %v1151 = vld [vmem:[%s3 + $0x318] sm:$0xff]
        %v1152 = vld [vmem:[%s3 + $0x320] sm:$0xff]
        %v1153 = vld [vmem:[%s3 + $0x328] sm:$0xff]
        %v1154 = vld [vmem:[%s3 + $0x330] sm:$0xff]
        %v1155 = vld [vmem:[%s3 + $0x338] sm:$0xff]
        %v1156 = vld [vmem:[%s3 + $0x340] sm:$0xff]
        %v1157 = vld [vmem:[%s3 + $0x348] sm:$0xff]
        %v1158 = vld [vmem:[%s3 + $0x350] sm:$0xff]
        %v1159 = vld [vmem:[%s3 + $0x358] sm:$0xff]
        %v1160 = vld [vmem:[%s3 + $0x360] sm:$0xff]
        %v1161 = vld [vmem:[%s3 + $0x368] sm:$0xff]
        %v1162 = vld [vmem:[%s3 + $0x370] sm:$0xff]
        %v1163 = vld [vmem:[%s3 + $0x378] sm:$0xff]
        %v1164 = vld [vmem:[%s3 + $0x380] sm:$0xff]
        %v1165 = vld [vmem:[%s3 + $0x388] sm:$0xff]
        %v1166 = vld [vmem:[%s3 + $0x390] sm:$0xff]
        %v1167 = vld [vmem:[%s3 + $0x398] sm:$0xff]
        %v1168 = vld [vmem:[%s3 + $0x3a0] sm:$0xff]
        %v1169 = vld [vmem:[%s3 + $0x3a8] sm:$0xff]
        %v1170 = vld [vmem:[%s3 + $0x3b0] sm:$0xff]
        %v1171 = vld [vmem:[%s3 + $0x3b8] sm:$0xff]
        %v1172 = vld [vmem:[%s3 + $0x3c0] sm:$0xff]
        %v1173 = vld [vmem:[%s3 + $0x3c8] sm:$0xff]
        %v1174 = vld [vmem:[%s3 + $0x3d0] sm:$0xff]
        %v1175 = vld [vmem:[%s3 + $0x3d8] sm:$0xff]
        %v1176 = vld [vmem:[%s3 + $0x3e0] sm:$0xff]
        %v1177 = vld [vmem:[%s3 + $0x3e8] sm:$0xff]
        %v1178 = vld [vmem:[%s3 + $0x3f0] sm:$0xff]
        %v1179 = vld [vmem:[%s3 + $0x3f8] sm:$0xff]
        %v1180 = vld [vmem:[%s4] sm:$0xf]
        %v1182 = vlaneseq
        %v1183 = vshrl.u32 %v1182, 7
        %v1184 = vsub.s32 0, %v1183
        %v1185 = vrot.slane %v1180, %v1184
        %v1186 = vlaneseq
        %v1187 = vshrl.u32 %v1186, 7
        %v1188 = vsub.s32 1, %v1187
        %v1189 = vrot.slane %v1180, %v1188
        %v1190 = vlaneseq
        %v1191 = vshrl.u32 %v1190, 7
        %v1192 = vsub.s32 2, %v1191
        %v1193 = vrot.slane %v1180, %v1192
        %v1194 = vlaneseq
        %v1195 = vshrl.u32 %v1194, 7
        %v1196 = vsub.s32 3, %v1195
        %v1197 = vrot.slane %v1180, %v1196
        %1202 = vmatprep.subr.mxu0 %v1053
        %1203 = vmatpush1.msra.mxu0 %v1052
        %1204 = vmatprep.subr.mxu0 %v1057
        %1205 = vmatpush1.msra.mxu0 %v1056
        %1206 = vmatprep.subr.mxu0 %v1061
        %1207 = vmatpush1.msra.mxu0 %v1060
        %1208 = vmatprep.subr.mxu0 %v1065
        %1209 = vmatpush1.msra.mxu0 %v1064
        %1210 = vmatprep.subr.mxu0 %v1069
        %1211 = vmatpush1.msra.mxu0 %v1068
        %1212 = vmatprep.subr.mxu0 %v1073
        %1213 = vmatpush1.msra.mxu0 %v1072
        %1214 = vmatprep.subr.mxu0 %v1077
        %1215 = vmatpush1.msra.mxu0 %v1076
        %1216 = vmatprep.subr.mxu0 %v1081
        %1217 = vmatpush1.msra.mxu0 %v1080
        %1218 = vmatprep.subr.mxu0 %v1085
        %1219 = vmatpush1.msra.mxu0 %v1084
        %1220 = vmatprep.subr.mxu0 %v1089
        %1221 = vmatpush1.msra.mxu0 %v1088
        %1222 = vmatprep.subr.mxu0 %v1093
        %1223 = vmatpush1.msra.mxu0 %v1092
        %1224 = vmatprep.subr.mxu0 %v1097
        %1225 = vmatpush1.msra.mxu0 %v1096
        %1226 = vmatprep.subr.mxu0 %v1101
        %1227 = vmatpush1.msra.mxu0 %v1100
        %1228 = vmatprep.subr.mxu0 %v1105
        %1229 = vmatpush1.msra.mxu0 %v1104
        %1230 = vmatprep.subr.mxu0 %v1109
        %1231 = vmatpush1.msra.mxu0 %v1108
        %1232 = vmatprep.subr.mxu0 %v1113
        %1233 = vmatpush1.msra.mxu0 %v1112
        %1234 = vmatprep.subr.mxu0 %v1117
        %1235 = vmatpush1.msra.mxu0 %v1116
        %1236 = vmatprep.subr.mxu0 %v1121
        %1237 = vmatpush1.msra.mxu0 %v1120
        %1238 = vmatprep.subr.mxu0 %v1125
        %1239 = vmatpush1.msra.mxu0 %v1124
        %1240 = vmatprep.subr.mxu0 %v1129
        %1241 = vmatpush1.msra.mxu0 %v1128
        %1242 = vmatprep.subr.mxu0 %v1133
        %1243 = vmatpush1.msra.mxu0 %v1132
        %1244 = vmatprep.subr.mxu0 %v1137
        %1245 = vmatpush1.msra.mxu0 %v1136
        %1246 = vmatprep.subr.mxu0 %v1141
        %1247 = vmatpush1.msra.mxu0 %v1140
        %1248 = vmatprep.subr.mxu0 %v1145
        %1249 = vmatpush1.msra.mxu0 %v1144
        %1250 = vmatprep.subr.mxu0 %v1149
        %1251 = vmatpush1.msra.mxu0 %v1148
        %1252 = vmatprep.subr.mxu0 %v1153
        %1253 = vmatpush1.msra.mxu0 %v1152
        %1254 = vmatprep.subr.mxu0 %v1157
        %1255 = vmatpush1.msra.mxu0 %v1156
        %1256 = vmatprep.subr.mxu0 %v1161
        %1257 = vmatpush1.msra.mxu0 %v1160
        %1258 = vmatprep.subr.mxu0 %v1165
        %1259 = vmatpush1.msra.mxu0 %v1164
        %1260 = vmatprep.subr.mxu0 %v1169
        %1261 = vmatpush1.msra.mxu0 %v1168
        %1262 = vmatprep.subr.mxu0 %v1173
        %1263 = vmatpush1.msra.mxu0 %v1172
        %1264 = vmatprep.subr.mxu0 %v1177
        %1265 = vmatpush1.msra.mxu0 %v1176
        %1266 = vmatprep.mubr.f32.mxu0 %v1051
        %1267 = vmatmul.mubr.f32.gmra.mrb[0].mxu0 %v1050
        %v1268 = vpop.f32.mrb[0].mxu0
        %v1269 = vadd.f32 %v1185, %v1268
        %v1270 = vpop.f32.mrb[0].mxu0
        %v1271 = vadd.f32 %v1189, %v1270
        %1272 = vdwg.mxu0
        %1273 = vmatprep.subr.mxu0 %v1055
        %1274 = vmatpush1.msra.mxu0 %v1054
        %1275 = vmatprep.subr.mxu0 %v1059
        %1276 = vmatpush1.msra.mxu0 %v1058
        %1277 = vmatprep.subr.mxu0 %v1063
        %1278 = vmatpush1.msra.mxu0 %v1062
        %1279 = vmatprep.subr.mxu0 %v1067
        %1280 = vmatpush1.msra.mxu0 %v1066
        %1281 = vmatprep.subr.mxu0 %v1071
        %1282 = vmatpush1.msra.mxu0 %v1070
        %1283 = vmatprep.subr.mxu0 %v1075
        %1284 = vmatpush1.msra.mxu0 %v1074
        %1285 = vmatprep.subr.mxu0 %v1079
        %1286 = vmatpush1.msra.mxu0 %v1078
        %1287 = vmatprep.subr.mxu0 %v1083
        %1288 = vmatpush1.msra.mxu0 %v1082
        %1289 = vmatprep.subr.mxu0 %v1087
        %1290 = vmatpush1.msra.mxu0 %v1086
        %1291 = vmatprep.subr.mxu0 %v1091
        %1292 = vmatpush1.msra.mxu0 %v1090
        %1293 = vmatprep.subr.mxu0 %v1095
        %1294 = vmatpush1.msra.mxu0 %v1094
        %1295 = vmatprep.subr.mxu0 %v1099
        %1296 = vmatpush1.msra.mxu0 %v1098
        %1297 = vmatprep.subr.mxu0 %v1103
        %1298 = vmatpush1.msra.mxu0 %v1102
        %1299 = vmatprep.subr.mxu0 %v1107
        %1300 = vmatpush1.msra.mxu0 %v1106
        %1301 = vmatprep.subr.mxu0 %v1111
        %1302 = vmatpush1.msra.mxu0 %v1110
        %1303 = vmatprep.subr.mxu0 %v1115
        %1304 = vmatpush1.msra.mxu0 %v1114
        %1305 = vmatprep.subr.mxu0 %v1119
        %1306 = vmatpush1.msra.mxu0 %v1118
        %1307 = vmatprep.subr.mxu0 %v1123
        %1308 = vmatpush1.msra.mxu0 %v1122
        %1309 = vmatprep.subr.mxu0 %v1127
        %1310 = vmatpush1.msra.mxu0 %v1126
        %1311 = vmatprep.subr.mxu0 %v1131
        %1312 = vmatpush1.msra.mxu0 %v1130
        %1313 = vmatprep.subr.mxu0 %v1135
        %1314 = vmatpush1.msra.mxu0 %v1134
        %1315 = vmatprep.subr.mxu0 %v1139
        %1316 = vmatpush1.msra.mxu0 %v1138
        %1317 = vmatprep.subr.mxu0 %v1143
        %1318 = vmatpush1.msra.mxu0 %v1142
        %1319 = vmatprep.subr.mxu0 %v1147
        %1320 = vmatpush1.msra.mxu0 %v1146
        %1321 = vmatprep.subr.mxu0 %v1151
        %1322 = vmatpush1.msra.mxu0 %v1150
        %1323 = vmatprep.subr.mxu0 %v1155
        %1324 = vmatpush1.msra.mxu0 %v1154
        %1325 = vmatprep.subr.mxu0 %v1159
        %1326 = vmatpush1.msra.mxu0 %v1158
        %1327 = vmatprep.subr.mxu0 %v1163
        %1328 = vmatpush1.msra.mxu0 %v1162
        %1329 = vmatprep.subr.mxu0 %v1167
        %1330 = vmatpush1.msra.mxu0 %v1166
        %1331 = vmatprep.subr.mxu0 %v1171
        %1332 = vmatpush1.msra.mxu0 %v1170
        %1333 = vmatprep.subr.mxu0 %v1175
        %1334 = vmatpush1.msra.mxu0 %v1174
        %1335 = vmatprep.subr.mxu0 %v1179
        %1336 = vmatpush1.msra.mxu0 %v1178
        %1337 = vmatprep.mubr.f32.mxu0 %v1051
        %1338 = vmatmul.mubr.f32.gmra.mrb[0].mxu0 %v1050
        %v1339 = vpop.f32.mrb[0].mxu0
        %v1340 = vadd.f32 %v1193, %v1339
        %v1341 = vpop.f32.mrb[0].mxu0
        %v1342 = vadd.f32 %v1197, %v1341
        %1343 = vdwg.mxu0
        %v1344 = vmax.f32 %v1269, 0.0
        %v1345 = vmax.f32 %v1271, 0.0
        %v1346 = vmax.f32 %v1340, 0.0
        %v1347 = vmax.f32 %v1342, 0.0
        %v1348 = vmax.f32 %v1344, %v1345
        %v1349 = vmax.f32 %v1346, %v1347
        %v1350 = vmax.f32 %v1348, %v1349
        %v1351 = vld [vmem:[%s5] sm:$0xff]
        %v1352 = vld [vmem:[%s5 + $0x8] sm:$0xff]
        %v1353 = vld [vmem:[%s5 + $0x10] sm:$0xff]
        %v1354 = vld [vmem:[%s5 + $0x18] sm:$0xff]
        %v1355 = vld [vmem:[%s5 + $0x20] sm:$0xff]
        %v1356 = vld [vmem:[%s5 + $0x28] sm:$0xff]
        %v1357 = vld [vmem:[%s5 + $0x30] sm:$0xff]
        %v1358 = vld [vmem:[%s5 + $0x38] sm:$0xff]
        %v1359 = vld [vmem:[%s5 + $0x40] sm:$0xff]
        %v1360 = vld [vmem:[%s5 + $0x48] sm:$0xff]
        %v1361 = vld [vmem:[%s5 + $0x50] sm:$0xff]
        %v1362 = vld [vmem:[%s5 + $0x58] sm:$0xff]
        %v1363 = vld [vmem:[%s5 + $0x60] sm:$0xff]
        %v1364 = vld [vmem:[%s5 + $0x68] sm:$0xff]
        %v1365 = vld [vmem:[%s5 + $0x70] sm:$0xff]
        %v1366 = vld [vmem:[%s5 + $0x78] sm:$0xff]
        %v1367 = vld [vmem:[%s6] sm:$0x1]
        %v1369 = vlaneseq
        %v1370 = vshrl.u32 %v1369, 7
        %v1371 = vsub.s32 0, %v1370
        %v1372 = vrot.slane %v1367, %v1371
        %1374 = vmatprep.subr.mxu0 0.0
        %1375 = vmatpush1.msra.mxu0 %v1351
        %1376 = vmatprep.subr.mxu0 0.0
        %1377 = vmatpush1.msra.mxu0 %v1352
        %1378 = vmatprep.subr.mxu0 0.0
        %1379 = vmatpush1.msra.mxu0 %v1353
        %1380 = vmatprep.subr.mxu0 0.0
        %1381 = vmatpush1.msra.mxu0 %v1354
        %1382 = vmatprep.subr.mxu0 0.0
        %1383 = vmatpush1.msra.mxu0 %v1355
        %1384 = vmatprep.subr.mxu0 0.0
        %1385 = vmatpush1.msra.mxu0 %v1356
        %1386 = vmatprep.subr.mxu0 0.0
        %1387 = vmatpush1.msra.mxu0 %v1357
        %1388 = vmatprep.subr.mxu0 0.0
        %1389 = vmatpush1.msra.mxu0 %v1358
        %1390 = vmatprep.subr.mxu0 0.0
        %1391 = vmatpush1.msra.mxu0 %v1359
        %1392 = vmatprep.subr.mxu0 0.0
        %1393 = vmatpush1.msra.mxu0 %v1360
        %1394 = vmatprep.subr.mxu0 0.0
        %1395 = vmatpush1.msra.mxu0 %v1361
        %1396 = vmatprep.subr.mxu0 0.0
        %1397 = vmatpush1.msra.mxu0 %v1362
        %1398 = vmatprep.subr.mxu0 0.0
        %1399 = vmatpush1.msra.mxu0 %v1363
        %1400 = vmatprep.subr.mxu0 0.0
        %1401 = vmatpush1.msra.mxu0 %v1364
        %1402 = vmatprep.subr.mxu0 0.0
        %1403 = vmatpush1.msra.mxu0 %v1365
        %1404 = vmatprep.subr.mxu0 0.0
        %1405 = vmatpush1.msra.mxu0 %v1366
        %1406 = vmatprep.subr.mxu0 0.0
        %1407 = vmatpush1.msra.mxu0 0.0
        %1408 = vmatprep.subr.mxu0 0.0
        %1409 = vmatpush1.msra.mxu0 0.0
        %1410 = vmatprep.subr.mxu0 0.0
        %1411 = vmatpush1.msra.mxu0 0.0
        %1412 = vmatprep.subr.mxu0 0.0
        %1413 = vmatpush1.msra.mxu0 0.0
        %1414 = vmatprep.subr.mxu0 0.0
        %1415 = vmatpush1.msra.mxu0 0.0
        %1416 = vmatprep.subr.mxu0 0.0
        %1417 = vmatpush1.msra.mxu0 0.0
        %1418 = vmatprep.subr.mxu0 0.0
        %1419 = vmatpush1.msra.mxu0 0.0
        %1420 = vmatprep.subr.mxu0 0.0
        %1421 = vmatpush1.msra.mxu0 0.0
        %1422 = vmatprep.subr.mxu0 0.0
        %1423 = vmatpush1.msra.mxu0 0.0
        %1424 = vmatprep.subr.mxu0 0.0
        %1425 = vmatpush1.msra.mxu0 0.0
        %1426 = vmatprep.subr.mxu0 0.0
        %1427 = vmatpush1.msra.mxu0 0.0
        %1428 = vmatprep.subr.mxu0 0.0
        %1429 = vmatpush1.msra.mxu0 0.0
        %1430 = vmatprep.subr.mxu0 0.0
        %1431 = vmatpush1.msra.mxu0 0.0
        %1432 = vmatprep.subr.mxu0 0.0
        %1433 = vmatpush1.msra.mxu0 0.0
        %1434 = vmatprep.subr.mxu0 0.0
        %1435 = vmatpush1.msra.mxu0 0.0
        %1436 = vmatprep.subr.mxu0 0.0
        %1437 = vmatpush1.msra.mxu0 0.0
        %1438 = vmatprep.mubr.f32.mxu0 0.0
        %1439 = vmatmul.mubr.f32.gmra.mrb[0].mxu0 %v1350
        %v1440 = vpop.f32.mrb[0].mxu0
        %v1441 = vadd.f32 %v1372, %v1440
        %v1442 = vpop.f32.mrb[0].mxu0
        %1443 = vdwg.mxu0
        %v1444 = vmax.f32 %v1441, 0.0
        %v1445 = vld [vmem:[%s7] sm:$0xff]
        %v1446 = vld [vmem:[%s7 + $0x8] sm:$0xff]
        %v1447 = vld [vmem:[%s7 + $0x10] sm:$0xff]
        %v1448 = vld [vmem:[%s7 + $0x18] sm:$0xff]
        %v1449 = vld [vmem:[%s7 + $0x20] sm:$0xff]
        %v1450 = vld [vmem:[%s7 + $0x28] sm:$0xff]
        %v1451 = vld [vmem:[%s7 + $0x30] sm:$0xff]
        %v1452 = vld [vmem:[%s7 + $0x38] sm:$0xff]
        %v1453 = vld [vmem:[%s7 + $0x40] sm:$0xff]
        %v1454 = vld [vmem:[%s7 + $0x48] sm:$0xff]
        %v1455 = vld [vmem:[%s7 + $0x50] sm:$0xff]
        %v1456 = vld [vmem:[%s7 + $0x58] sm:$0xff]
        %v1457 = vld [vmem:[%s7 + $0x60] sm:$0xff]
        %v1458 = vld [vmem:[%s7 + $0x68] sm:$0xff]
        %v1459 = vld [vmem:[%s7 + $0x70] sm:$0xff]
        %v1460 = vld [vmem:[%s8] sm:$0x1]
        %v1462 = vlaneseq
        %v1463 = vshrl.u32 %v1462, 7
        %v1464 = vsub.s32 0, %v1463
        %v1465 = vrot.slane %v1460, %v1464
        %vm1467 = vcmask 982016
        %v1469 = vsel %vm1467, %v1444, 0
        %1471 = vmatprep.subr.mxu0 0.0
        %1472 = vmatpush1.msra.mxu0 %v1445
        %1473 = vmatprep.subr.mxu0 0.0
        %1474 = vmatpush1.msra.mxu0 %v1446
        %1475 = vmatprep.subr.mxu0 0.0
        %1476 = vmatpush1.msra.mxu0 %v1447
        %1477 = vmatprep.subr.mxu0 0.0
        %1478 = vmatpush1.msra.mxu0 %v1448
        %1479 = vmatprep.subr.mxu0 0.0
        %1480 = vmatpush1.msra.mxu0 %v1449
        %1481 = vmatprep.subr.mxu0 0.0
        %1482 = vmatpush1.msra.mxu0 %v1450
        %1483 = vmatprep.subr.mxu0 0.0
        %1484 = vmatpush1.msra.mxu0 %v1451
        %1485 = vmatprep.subr.mxu0 0.0
        %1486 = vmatpush1.msra.mxu0 %v1452
        %1487 = vmatprep.subr.mxu0 0.0
        %1488 = vmatpush1.msra.mxu0 %v1453
        %1489 = vmatprep.subr.mxu0 0.0
        %1490 = vmatpush1.msra.mxu0 %v1454
        %1491 = vmatprep.subr.mxu0 0.0
        %1492 = vmatpush1.msra.mxu0 %v1455
        %1493 = vmatprep.subr.mxu0 0.0
        %1494 = vmatpush1.msra.mxu0 %v1456
        %1495 = vmatprep.subr.mxu0 0.0
        %1496 = vmatpush1.msra.mxu0 %v1457
        %1497 = vmatprep.subr.mxu0 0.0
        %1498 = vmatpush1.msra.mxu0 %v1458
        %1499 = vmatprep.subr.mxu0 0.0
        %1500 = vmatpush1.msra.mxu0 %v1459
        %1501 = vmatprep.subr.mxu0 0.0
        %1502 = vmatpush1.msra.mxu0 0.0
        %1503 = vmatprep.subr.mxu0 0.0
        %1504 = vmatpush1.msra.mxu0 0.0
        %1505 = vmatprep.subr.mxu0 0.0
        %1506 = vmatpush1.msra.mxu0 0.0
        %1507 = vmatprep.subr.mxu0 0.0
        %1508 = vmatpush1.msra.mxu0 0.0
        %1509 = vmatprep.subr.mxu0 0.0
        %1510 = vmatpush1.msra.mxu0 0.0
        %1511 = vmatprep.subr.mxu0 0.0
        %1512 = vmatpush1.msra.mxu0 0.0
        %1513 = vmatprep.subr.mxu0 0.0
        %1514 = vmatpush1.msra.mxu0 0.0
        %1515 = vmatprep.subr.mxu0 0.0
        %1516 = vmatpush1.msra.mxu0 0.0
        %1517 = vmatprep.subr.mxu0 0.0
        %1518 = vmatpush1.msra.mxu0 0.0
        %1519 = vmatprep.subr.mxu0 0.0
        %1520 = vmatpush1.msra.mxu0 0.0
        %1521 = vmatprep.subr.mxu0 0.0
        %1522 = vmatpush1.msra.mxu0 0.0
        %1523 = vmatprep.subr.mxu0 0.0
        %1524 = vmatpush1.msra.mxu0 0.0
        %1525 = vmatprep.subr.mxu0 0.0
        %1526 = vmatpush1.msra.mxu0 0.0
        %1527 = vmatprep.subr.mxu0 0.0
        %1528 = vmatpush1.msra.mxu0 0.0
        %1529 = vmatprep.subr.mxu0 0.0
        %1530 = vmatpush1.msra.mxu0 0.0
        %1531 = vmatprep.subr.mxu0 0.0
        %1532 = vmatpush1.msra.mxu0 0.0
        %1533 = vmatprep.subr.mxu0 0.0
        %1534 = vmatpush1.msra.mxu0 0.0
        %1535 = vmatprep.mubr.f32.mxu0 0.0
        %1536 = vmatmul.mubr.f32.gmra.mrb[0].mxu0 %v1469
        %v1537 = vpop.f32.mrb[0].mxu0
        %v1538 = vadd.f32 %v1465, %v1537
        %v1539 = vpop.f32.mrb[0].mxu0
        %1540 = vdwg.mxu0
        %v1541 = vmax.f32 %v1538, 0.0
        %v1542 = vld [vmem:[%s9] sm:$0xff]
        %v1543 = vld [vmem:[%s9 + $0x8] sm:$0xff]
        %v1544 = vld [vmem:[%s9 + $0x10] sm:$0xff]
        %v1545 = vld [vmem:[%s9 + $0x18] sm:$0xff]
        %v1546 = vld [vmem:[%s9 + $0x20] sm:$0xff]
        %v1547 = vld [vmem:[%s9 + $0x28] sm:$0xff]
        %v1548 = vld [vmem:[%s9 + $0x30] sm:$0xff]
        %v1549 = vld [vmem:[%s9 + $0x38] sm:$0xff]
        %v1550 = vld [vmem:[%s9 + $0x40] sm:$0xff]
        %v1551 = vld [vmem:[%s9 + $0x48] sm:$0xff]
        %v1552 = vld [vmem:[%s9 + $0x50] sm:$0xf]
        %v1553 = vld [vmem:[%s10] sm:$0x1]
        %v1555 = vlaneseq
        %v1556 = vshrl.u32 %v1555, 7
        %v1557 = vsub.s32 0, %v1556
        %v1558 = vrot.slane %v1553, %v1557
        %vm1560 = vcmask 687104
        %v1562 = vsel %vm1560, %v1541, 0
        %vm1564 = vcmask 1043456
        %v1566 = vsel %vm1564, %v1552, 0
        %1568 = vmatprep.subr.mxu0 0.0
        %1569 = vmatpush1.msra.mxu0 %v1542
        %1570 = vmatprep.subr.mxu0 0.0
        %1571 = vmatpush1.msra.mxu0 %v1543
        %1572 = vmatprep.subr.mxu0 0.0
        %1573 = vmatpush1.msra.mxu0 %v1544
        %1574 = vmatprep.subr.mxu0 0.0
        %1575 = vmatpush1.msra.mxu0 %v1545
        %1576 = vmatprep.subr.mxu0 0.0
        %1577 = vmatpush1.msra.mxu0 %v1546
        %1578 = vmatprep.subr.mxu0 0.0
        %1579 = vmatpush1.msra.mxu0 %v1547
        %1580 = vmatprep.subr.mxu0 0.0
        %1581 = vmatpush1.msra.mxu0 %v1548
        %1582 = vmatprep.subr.mxu0 0.0
        %1583 = vmatpush1.msra.mxu0 %v1549
        %1584 = vmatprep.subr.mxu0 0.0
        %1585 = vmatpush1.msra.mxu0 %v1550
        %1586 = vmatprep.subr.mxu0 0.0
        %1587 = vmatpush1.msra.mxu0 %v1551
        %1588 = vmatprep.subr.mxu0 0.0
        %1589 = vmatpush1.msra.mxu0 %v1566
        %1590 = vmatprep.subr.mxu0 0.0
        %1591 = vmatpush1.msra.mxu0 0.0
        %1592 = vmatprep.subr.mxu0 0.0
        %1593 = vmatpush1.msra.mxu0 0.0
        %1594 = vmatprep.subr.mxu0 0.0
        %1595 = vmatpush1.msra.mxu0 0.0
        %1596 = vmatprep.subr.mxu0 0.0
        %1597 = vmatpush1.msra.mxu0 0.0
        %1598 = vmatprep.subr.mxu0 0.0
        %1599 = vmatpush1.msra.mxu0 0.0
        %1600 = vmatprep.subr.mxu0 0.0
        %1601 = vmatpush1.msra.mxu0 0.0
        %1602 = vmatprep.subr.mxu0 0.0
        %1603 = vmatpush1.msra.mxu0 0.0
        %1604 = vmatprep.subr.mxu0 0.0
        %1605 = vmatpush1.msra.mxu0 0.0
        %1606 = vmatprep.subr.mxu0 0.0
        %1607 = vmatpush1.msra.mxu0 0.0
        %1608 = vmatprep.subr.mxu0 0.0
        %1609 = vmatpush1.msra.mxu0 0.0
        %1610 = vmatprep.subr.mxu0 0.0
        %1611 = vmatpush1.msra.mxu0 0.0
        %1612 = vmatprep.subr.mxu0 0.0
        %1613 = vmatpush1.msra.mxu0 0.0
        %1614 = vmatprep.subr.mxu0 0.0
        %1615 = vmatpush1.msra.mxu0 0.0
        %1616 = vmatprep.subr.mxu0 0.0
        %1617 = vmatpush1.msra.mxu0 0.0
        %1618 = vmatprep.subr.mxu0 0.0
        %1619 = vmatpush1.msra.mxu0 0.0
        %1620 = vmatprep.subr.mxu0 0.0
        %1621 = vmatpush1.msra.mxu0 0.0
        %1622 = vmatprep.subr.mxu0 0.0
        %1623 = vmatpush1.msra.mxu0 0.0
        %1624 = vmatprep.subr.mxu0 0.0
        %1625 = vmatpush1.msra.mxu0 0.0
        %1626 = vmatprep.subr.mxu0 0.0
        %1627 = vmatpush1.msra.mxu0 0.0
        %1628 = vmatprep.subr.mxu0 0.0
        %1629 = vmatpush1.msra.mxu0 0.0
        %1630 = vmatprep.subr.mxu0 0.0
        %1631 = vmatpush1.msra.mxu0 0.0
        %1632 = vmatprep.mubr.f32.mxu0 0.0
        %1633 = vmatmul.mubr.f32.gmra.mrb[0].mxu0 %v1562
        %v1634 = vpop.f32.mrb[0].mxu0
        %v1635 = vadd.f32 %v1558, %v1634
        %v1636 = vpop.f32.mrb[0].mxu0
        %1637 = vdwg.mxu0
        %v1638 = vld [vmem:[%s11] sm:$0xff]
        %v1639 = vld [vmem:[%s11 + $0x8] sm:$0xff]
        %v1640 = vld [vmem:[%s11 + $0x10] sm:$0xff]
        %v1641 = vld [vmem:[%s11 + $0x18] sm:$0xff]
        %v1642 = vld [vmem:[%s11 + $0x20] sm:$0xff]
        %v1643 = vld [vmem:[%s11 + $0x28] sm:$0xff]
        %v1644 = vld [vmem:[%s11 + $0x30] sm:$0xff]
        %v1645 = vld [vmem:[%s11 + $0x38] sm:$0xff]
        %v1646 = vld [vmem:[%s12] sm:$0x1]
        %v1648 = vlaneseq
        %v1649 = vshrl.u32 %v1648, 7
        %v1650 = vsub.s32 0, %v1649
        %v1651 = vrot.slane %v1646, %v1650
        %vm1653 = vcmask 523264
        %v1655 = vsel %vm1653, %v1635, 0
        %1657 = vmatprep.subr.mxu0 0.0
        %1658 = vmatpush1.msra.mxu0 %v1638
        %1659 = vmatprep.subr.mxu0 0.0
        %1660 = vmatpush1.msra.mxu0 %v1639
        %1661 = vmatprep.subr.mxu0 0.0
        %1662 = vmatpush1.msra.mxu0 %v1640
        %1663 = vmatprep.subr.mxu0 0.0
        %1664 = vmatpush1.msra.mxu0 %v1641
        %1665 = vmatprep.subr.mxu0 0.0
        %1666 = vmatpush1.msra.mxu0 %v1642
        %1667 = vmatprep.subr.mxu0 0.0
        %1668 = vmatpush1.msra.mxu0 %v1643
        %1669 = vmatprep.subr.mxu0 0.0
        %1670 = vmatpush1.msra.mxu0 %v1644
        %1671 = vmatprep.subr.mxu0 0.0
        %1672 = vmatpush1.msra.mxu0 %v1645
        %1673 = vmatprep.subr.mxu0 0.0
        %1674 = vmatpush1.msra.mxu0 0.0
        %1675 = vmatprep.subr.mxu0 0.0
        %1676 = vmatpush1.msra.mxu0 0.0
        %1677 = vmatprep.subr.mxu0 0.0
        %1678 = vmatpush1.msra.mxu0 0.0
        %1679 = vmatprep.subr.mxu0 0.0
        %1680 = vmatpush1.msra.mxu0 0.0
        %1681 = vmatprep.subr.mxu0 0.0
        %1682 = vmatpush1.msra.mxu0 0.0
        %1683 = vmatprep.subr.mxu0 0.0
        %1684 = vmatpush1.msra.mxu0 0.0
        %1685 = vmatprep.subr.mxu0 0.0
        %1686 = vmatpush1.msra.mxu0 0.0
        %1687 = vmatprep.subr.mxu0 0.0
        %1688 = vmatpush1.msra.mxu0 0.0
        %1689 = vmatprep.subr.mxu0 0.0
        %1690 = vmatpush1.msra.mxu0 0.0
        %1691 = vmatprep.subr.mxu0 0.0
        %1692 = vmatpush1.msra.mxu0 0.0
        %1693 = vmatprep.subr.mxu0 0.0
        %1694 = vmatpush1.msra.mxu0 0.0
        %1695 = vmatprep.subr.mxu0 0.0
        %1696 = vmatpush1.msra.mxu0 0.0
        %1697 = vmatprep.subr.mxu0 0.0
        %1698 = vmatpush1.msra.mxu0 0.0
        %1699 = vmatprep.subr.mxu0 0.0
        %1700 = vmatpush1.msra.mxu0 0.0
        %1701 = vmatprep.subr.mxu0 0.0
        %1702 = vmatpush1.msra.mxu0 0.0
        %1703 = vmatprep.subr.mxu0 0.0
        %1704 = vmatpush1.msra.mxu0 0.0
        %1705 = vmatprep.subr.mxu0 0.0
        %1706 = vmatpush1.msra.mxu0 0.0
        %1707 = vmatprep.subr.mxu0 0.0
        %1708 = vmatpush1.msra.mxu0 0.0
        %1709 = vmatprep.subr.mxu0 0.0
        %1710 = vmatpush1.msra.mxu0 0.0
        %1711 = vmatprep.subr.mxu0 0.0
        %1712 = vmatpush1.msra.mxu0 0.0
        %1713 = vmatprep.subr.mxu0 0.0
        %1714 = vmatpush1.msra.mxu0 0.0
        %1715 = vmatprep.subr.mxu0 0.0
        %1716 = vmatpush1.msra.mxu0 0.0
        %1717 = vmatprep.subr.mxu0 0.0
        %1718 = vmatpush1.msra.mxu0 0.0
        %1719 = vmatprep.subr.mxu0 0.0
        %1720 = vmatpush1.msra.mxu0 0.0
        %1721 = vmatprep.mubr.f32.mxu0 0.0
        %1722 = vmatmul.mubr.f32.gmra.mrb[0].mxu0 %v1655
        %v1723 = vpop.f32.mrb[0].mxu0
        %v1724 = vadd.f32 %v1651, %v1723
        %v1725 = vpop.f32.mrb[0].mxu0
        %1726 = vdwg.mxu0
        %vm1727 = vcmask 80896
        %v1728 = vsel %vm1727, %v1724, -inf
        %1729 = vmax.xlane.f32.xlu0 %v1728
        %v1730 = vpop.xlane.xlu0 %1729
        %v1731 = vsub.f32 %v1724, %v1730
        %v1732 = vmul.f32 %v1731, 1.442695
        %v1733 = vpow.pop %v1732
        %v1734 = vsel %vm1727, %v1733, 0.0
        %1735 = vadd.xlane.f32.xlu0 %v1734
        %v1736 = vpop.xlane.xlu0 %1735
        %v1737 = vrcp.pop %v1736
        %v1738 = vmul.f32 %v1733, %v1737
        %1740 = vrot.lane.b32.xlu0 %v1738, 64
        %v1741 = vpop.permute.xlu0 %1740
        %v1743 = vsel %vm1653, %v1635, %v1741
        %vm1744 = vcmask 605184
        %v1745 = vsel %vm1744, %v1743, 0.0
        %1746 = vst [vmem:[%s453] sm:$0xff] %v1745
        %p1747 = scmp.lt.s32.totalorder %s25, 1
        %s1748 = scalar_select %p1747, %s25, 1
        %s1749 = smul.addr %s1748, 8
        %s1750 = scalar_lea.vmem %s13, %s1749
        // Predicated region
        $region77: #{siamese_forward.1} parent=71 // pred_check
          %p1751 = pneg %p321
        $region78: #{siamese_forward.1} parent=71 // pred_check_branch
          %1753 = sbr.rel (%p1751) target = $region80
        $region79: #{siamese_forward.1} parent=71 // pred_region
          _
        $region80: #{siamese_forward.1} parent=71 // pred_fallthru
          _
      $region72: #{siamese_forward.1} parent=5 // pred_fallthru
        _
      %p1754 = scmp.le.s32.totalorder 2, %s20
      // Predicated region
      $region81: #{siamese_forward.1} parent=5 // pred_check
        %p1755 = pneg %p1754
      $region82: #{siamese_forward.1} parent=5 // pred_check_branch
        %1757 = sbr.rel (%p1755) target = $region84
      $region83: #{siamese_forward.1} parent=5 // pred_region
        %s1758 = ssub.s32 %s20, 2
        // Predicated region
        $region85: #{siamese_forward.1} parent=83 // pred_check
          %p1759 = pneg %p327
        $region86: #{siamese_forward.1} parent=83 // pred_check_branch
          %1761 = sbr.rel (%p1759) target = $region88
        $region87: #{siamese_forward.1} parent=83 // pred_region
          %p1762 = scmp.lt.s32.totalorder %s26, 1
          %s1763 = scalar_select %p1762, %s26, 1
          %s1764 = smul.addr %s1763, 8
          %s1765 = scalar_lea.vmem %s13, %s1764
        $region88: #{siamese_forward.1} parent=83 // pred_fallthru
          _
      $region84: #{siamese_forward.1} parent=5 // pred_fallthru
        _
    $region6: #{siamese_forward.1} parent=1 // loop_footer
      %s24 = sadd.s32 1, %s20
    $region7: #{siamese_forward.1} parent=1 // loop_footer_branch
      %19 = sbr.rel target = $region3
    $region8: #{siamese_forward.1} parent=1 // loop_exit
      _
    %1766 = vsyncpa [#allocation3], 1
    %s1767 = scalar_lea.sflag [#allocation3], 1
    %1768 = vsyncpa %s1767, 1

</llo_original>
